<compile_context>
chip_gen: v7x
topology: tpu7x:2x2x1
jax: 0.10.0
libtpu: 0.0.40
codegen_flags: <defaults>
</compile_context>

<pallas_src>
from functools import partial

import jax
import jax.numpy as jnp
from jax import lax
from jax.experimental import pallas as pl
from jax.experimental.pallas import tpu as pltpu

# ---------------- small BERT config (scaled-down bert-base) ----------------
VOCAB = 100
TYPE_VOCAB = 2
MAX_POS = 16
HIDDEN = 32
N_LAYERS = 2
N_HEADS = 2
HEAD_DIM = HIDDEN // N_HEADS
INTERMEDIATE = 64
NUM_CLASSES = 3
LN_EPS = 1e-12

_INV_SQRT2 = 0.7071067811865476


# --------------------------- in-kernel helpers ------------------------------
def _ln(x, g, b):
    # LayerNorm statistics kept in f32
    mu = jnp.mean(x, axis=-1, keepdims=True)
    xc = x - mu
    var = jnp.mean(xc * xc, axis=-1, keepdims=True)
    return xc * lax.rsqrt(var + LN_EPS) * g + b


def _gelu(x):
    # exact (erf-based) GELU, as in HF BERT
    return 0.5 * x * (1.0 + lax.erf(x * _INV_SQRT2))


# --------------------- fully fused BERT forward kernel ----------------------
def _bert_fused_kernel(
    x_ref, mask_ref,
    emb_g_ref, emb_b_ref,
    qkv_w_ref, qkv_b_ref, o_w_ref, o_b_ref,
    ln1_g_ref, ln1_b_ref,
    ff1_w_ref, ff1_b_ref, ff2_w_ref, ff2_b_ref,
    ln2_g_ref, ln2_b_ref,
    pool_w_ref, pool_b_ref, cls_w_ref, cls_b_ref,
    out_ref,
):
    seq = x_ref.shape[0]                                        # S (per-batch slab)

    # Embedding LayerNorm fused into the same kernel (prologue).
    x = _ln(x_ref[...], emb_g_ref[...], emb_b_ref[...])        # (S, H) f32

    # Layer-invariant additive key mask, computed ONCE (hoisted out of loop).
    add_mask = (1.0 - mask_ref[...]) * (-1e9)                  # (1, S) f32

    scale = 1.0 / float(HEAD_DIM) ** 0.5

    def layer_body(l, h_in):
        xb = h_in.astype(jnp.bfloat16)

        # Fused Q|K|V projection: one (S, H) @ (H, 3H) bf16 MXU push, f32 acc.
        qkv = jnp.dot(xb, qkv_w_ref[l], preferred_element_type=jnp.float32)
        qkv = qkv + qkv_b_ref[l]                                # (S, 3H) f32
        qkvb = qkv.astype(jnp.bfloat16)
        o_w = o_w_ref[l]                                        # (H, H) bf16

        # Per-head attention; context is accumulated straight into the output
        # projection (no ctx scratch / concat). Softmax math stays f32.
        attn = jnp.zeros((seq, HIDDEN), jnp.float32)
        for hd in range(N_HEADS):
            c0 = hd * HEAD_DIM
            q = qkvb[:, c0:c0 + HEAD_DIM]                       # (S, Dh) bf16
            k = qkvb[:, HIDDEN + c0:HIDDEN + c0 + HEAD_DIM]
            v = qkvb[:, 2 * HIDDEN + c0:2 * HIDDEN + c0 + HEAD_DIM]

            s = lax.dot_general(
                q, k, (((1,), (1,)), ((), ())),
                preferred_element_type=jnp.float32,
            ) * scale                                           # (S, S) f32
            s = s + add_mask
            s = s - jnp.max(s, axis=-1, keepdims=True)
            p = jnp.exp(s)
            # divide -> multiply by EUP reciprocal (free slot)
            p = p * pl.reciprocal(jnp.sum(p, axis=-1, keepdims=True), approx=True)

            ctx = jnp.dot(p.astype(jnp.bfloat16), v,
                          preferred_element_type=jnp.float32)   # (S, Dh) f32
            attn = attn + jnp.dot(ctx.astype(jnp.bfloat16),
                                  o_w[c0:c0 + HEAD_DIM, :],
                                  preferred_element_type=jnp.float32)

        attn = attn + o_b_ref[l]
        h1 = _ln(attn + h_in, ln1_g_ref[l], ln1_b_ref[l])       # residual + LN1

        # FFN (GELU) + residual + LN2, all bf16 matmuls with f32 accumulation.
        ff = jnp.dot(h1.astype(jnp.bfloat16), ff1_w_ref[l],
                     preferred_element_type=jnp.float32) + ff1_b_ref[l]
        ff = _gelu(ff)
        ff = jnp.dot(ff.astype(jnp.bfloat16), ff2_w_ref[l],
                     preferred_element_type=jnp.float32) + ff2_b_ref[l]
        return _ln(ff + h1, ln2_g_ref[l], ln2_b_ref[l])

    x = lax.fori_loop(0, N_LAYERS, layer_body, x)               # (S, H) f32

    # Pooler (tanh dense on [CLS]) + classifier + softmax (exact), fused.
    cls_tok = x[0:1, :]                                         # (1, H)
    pooled = jnp.dot(cls_tok.astype(jnp.bfloat16), pool_w_ref[...],
                     preferred_element_type=jnp.float32) + pool_b_ref[...]
    pooled = jnp.tanh(pooled)
    # TODO(synk): dropout between pooler and classifier is identity at inference.
    logits = jnp.dot(pooled.astype(jnp.bfloat16), cls_w_ref[...],
                     preferred_element_type=jnp.float32) + cls_b_ref[...]
    e = jnp.exp(logits - jnp.max(logits, axis=-1, keepdims=True))
    out_ref[...] = e / jnp.sum(e, axis=-1, keepdims=True)       # (1, C)


def bert_fused_call(params, x_slab, mask3, B, S):
    """x_slab: (B*S, H) f32; mask3: (B, 1, S) f32 (1=attend, 0=pad)."""

    def resident(shape):
        nd = len(shape)
        return pl.BlockSpec(shape, lambda b, _nd=nd: (0,) * _nd)

    in_specs = [
        pl.BlockSpec((S, HIDDEN), lambda b: (b, 0)),                 # x slab (per batch)
        pl.BlockSpec((None, 1, S), lambda b: (b, 0, 0)),             # raw mask (per batch)
        resident((1, HIDDEN)), resident((1, HIDDEN)),                # emb LN
        resident((N_LAYERS, HIDDEN, 3 * HIDDEN)),                    # qkv_w (bf16)
        resident((N_LAYERS, 1, 3 * HIDDEN)),                         # qkv_b
        resident((N_LAYERS, HIDDEN, HIDDEN)),                        # o_w (bf16)
        resident((N_LAYERS, 1, HIDDEN)),                             # o_b
        resident((N_LAYERS, 1, HIDDEN)), resident((N_LAYERS, 1, HIDDEN)),   # ln1
        resident((N_LAYERS, HIDDEN, INTERMEDIATE)),                  # ff1_w (bf16)
        resident((N_LAYERS, 1, INTERMEDIATE)),                       # ff1_b
        resident((N_LAYERS, INTERMEDIATE, HIDDEN)),                  # ff2_w (bf16)
        resident((N_LAYERS, 1, HIDDEN)),                             # ff2_b
        resident((N_LAYERS, 1, HIDDEN)), resident((N_LAYERS, 1, HIDDEN)),   # ln2
        resident((HIDDEN, HIDDEN)), resident((1, HIDDEN)),           # pooler
        resident((HIDDEN, NUM_CLASSES)), resident((1, NUM_CLASSES)), # classifier
    ]

    out = pl.pallas_call(
        _bert_fused_kernel,
        out_shape=jax.ShapeDtypeStruct((B, 1, NUM_CLASSES), jnp.float32),
        grid=(B,),
        in_specs=in_specs,
        out_specs=pl.BlockSpec((None, 1, NUM_CLASSES), lambda b: (b, 0, 0)),
        compiler_params=pltpu.CompilerParams(
            dimension_semantics=("parallel",)),                      # v7x: 2 TCs
    )(
        x_slab, mask3,
        params["emb_ln_g"], params["emb_ln_b"],
        params["qkv_w"], params["qkv_b"], params["o_w"], params["o_b"],
        params["ln1_g"], params["ln1_b"],
        params["ff1_w"], params["ff1_b"], params["ff2_w"], params["ff2_b"],
        params["ln2_g"], params["ln2_b"],
        params["pool_w"], params["pool_b"], params["cls_w"], params["cls_b"],
    )
    return out.reshape(B, NUM_CLASSES)


# ----------------------------- parameters ----------------------------------
def init_params(key):
    def nxt():
        nonlocal key
        key, sub = jax.random.split(key)
        return sub

    def w(shape, dtype=jnp.bfloat16):
        return (0.02 * jax.random.normal(nxt(), shape)).astype(dtype)

    zeros = lambda s: jnp.zeros(s, jnp.float32)
    ones = lambda s: jnp.ones(s, jnp.float32)

    return {
        # embedding tables stay f32 (gathered in JAX glue)
        "word_emb": w((VOCAB, HIDDEN), jnp.float32),
        "pos_emb": w((MAX_POS, HIDDEN), jnp.float32),
        "type_emb": w((TYPE_VOCAB, HIDDEN), jnp.float32),
        "emb_ln_g": ones((1, HIDDEN)),
        "emb_ln_b": zeros((1, HIDDEN)),
        # per-layer weights stacked along a leading N_LAYERS dim;
        # matmul weights in bf16, biases / LN params in f32.
        "qkv_w": w((N_LAYERS, HIDDEN, 3 * HIDDEN)),
        "qkv_b": zeros((N_LAYERS, 1, 3 * HIDDEN)),
        "o_w": w((N_LAYERS, HIDDEN, HIDDEN)),
        "o_b": zeros((N_LAYERS, 1, HIDDEN)),
        "ln1_g": ones((N_LAYERS, 1, HIDDEN)),
        "ln1_b": zeros((N_LAYERS, 1, HIDDEN)),
        "ff1_w": w((N_LAYERS, HIDDEN, INTERMEDIATE)),
        "ff1_b": zeros((N_LAYERS, 1, INTERMEDIATE)),
        "ff2_w": w((N_LAYERS, INTERMEDIATE, HIDDEN)),
        "ff2_b": zeros((N_LAYERS, 1, HIDDEN)),
        "ln2_g": ones((N_LAYERS, 1, HIDDEN)),
        "ln2_b": zeros((N_LAYERS, 1, HIDDEN)),
        # pooler + classifier head
        "pool_w": w((HIDDEN, HIDDEN)),
        "pool_b": zeros((1, HIDDEN)),
        "cls_w": w((HIDDEN, NUM_CLASSES)),
        "cls_b": zeros((1, NUM_CLASSES)),
    }


# ------------------------------ forward -------------------------------------
@jax.jit
def bert_classifier_forward(params, input_ids, token_type_ids, attention_mask):
    B, S = input_ids.shape
    # TODO(synk): embedding table gathers (word/pos/type) are data-dependent row
    # gathers and stay in plain JAX, not inside the Pallas kernel.
    pos_ids = jnp.arange(S)
    emb = (
        jnp.take(params["word_emb"], input_ids, axis=0)
        + params["pos_emb"][pos_ids][None, :, :]
        + jnp.take(params["type_emb"], token_type_ids, axis=0)
    )
    x_slab = emb.reshape(B * S, HIDDEN).astype(jnp.float32)     # (B*S, H)
    mask3 = attention_mask.astype(jnp.float32).reshape(B, 1, S)  # raw mask

    # One fused pallas_call: emb LN + all encoder layers + pooler + softmax.
    return bert_fused_call(params, x_slab, mask3, B, S)          # (B, C) probs


# -------------------------------- main ---------------------------------------
if __name__ == "__main__":
    key = jax.random.PRNGKey(0)
    pkey, ikey = jax.random.split(key)
    params = init_params(pkey)

    B, S = 2, 8
    input_ids = jax.random.randint(ikey, (B, S), 0, VOCAB, dtype=jnp.int32)
    token_type_ids = jnp.zeros((B, S), jnp.int32)
    attention_mask = jnp.ones((B, S), jnp.int32).at[1, 6:].set(0)  # pad tail of seq 1

    probs = bert_classifier_forward(params, input_ids, token_type_ids, attention_mask)
    probs = jax.block_until_ready(probs)

    assert probs.shape == (B, NUM_CLASSES)
    assert bool(jnp.all(jnp.isfinite(probs)))
    assert bool(jnp.allclose(jnp.sum(probs, axis=1), 1.0, atol=1e-5))
    print("KERNEL_OK")
</pallas_src>

<mosaic_0001>
module attributes {stable_mosaic.version = 11 : i64} {
  func.func @_bert_fused_kernel(%arg0: i32, %arg1: memref<8x32xf32, #tpu.memory_space<vmem>>, %arg2: memref<1x1x8xf32, #tpu.memory_space<vmem>>, %arg3: memref<1x32xf32, #tpu.memory_space<vmem>>, %arg4: memref<1x32xf32, #tpu.memory_space<vmem>>, %arg5: memref<2x32x96xbf16, #tpu.memory_space<vmem>>, %arg6: memref<2x1x96xf32, #tpu.memory_space<vmem>>, %arg7: memref<2x32x32xbf16, #tpu.memory_space<vmem>>, %arg8: memref<2x1x32xf32, #tpu.memory_space<vmem>>, %arg9: memref<2x1x32xf32, #tpu.memory_space<vmem>>, %arg10: memref<2x1x32xf32, #tpu.memory_space<vmem>>, %arg11: memref<2x32x64xbf16, #tpu.memory_space<vmem>>, %arg12: memref<2x1x64xf32, #tpu.memory_space<vmem>>, %arg13: memref<2x64x32xbf16, #tpu.memory_space<vmem>>, %arg14: memref<2x1x32xf32, #tpu.memory_space<vmem>>, %arg15: memref<2x1x32xf32, #tpu.memory_space<vmem>>, %arg16: memref<2x1x32xf32, #tpu.memory_space<vmem>>, %arg17: memref<32x32xbf16, #tpu.memory_space<vmem>>, %arg18: memref<1x32xf32, #tpu.memory_space<vmem>>, %arg19: memref<32x3xbf16, #tpu.memory_space<vmem>>, %arg20: memref<1x3xf32, #tpu.memory_space<vmem>>, %arg21: memref<1x1x3xf32, #tpu.memory_space<vmem>>) attributes {dimension_semantics = [#tpu.dimension_semantics<parallel>], iteration_bounds = array<i64: 2>, scalar_prefetch = 0 : i64, scratch_operands = 0 : i64, tpu.core_type = #tpu.core_type<tc>, window_params = [{transform_indices = @transform_0, window_bounds = array<i64: 8, 32>}, {transform_indices = @transform_1, window_bounds = array<i64: 1, 1, 8>}, {pipeline_mode = #tpu.pipeline_mode<synchronous>, transform_indices = @transform_2, window_bounds = array<i64: 1, 32>}, {pipeline_mode = #tpu.pipeline_mode<synchronous>, transform_indices = @transform_3, window_bounds = array<i64: 1, 32>}, {pipeline_mode = #tpu.pipeline_mode<synchronous>, transform_indices = @transform_4, window_bounds = array<i64: 2, 32, 96>}, {pipeline_mode = #tpu.pipeline_mode<synchronous>, transform_indices = @transform_5, window_bounds = array<i64: 2, 1, 96>}, {pipeline_mode = #tpu.pipeline_mode<synchronous>, transform_indices = @transform_6, window_bounds = array<i64: 2, 32, 32>}, {pipeline_mode = #tpu.pipeline_mode<synchronous>, transform_indices = @transform_7, window_bounds = array<i64: 2, 1, 32>}, {pipeline_mode = #tpu.pipeline_mode<synchronous>, transform_indices = @transform_8, window_bounds = array<i64: 2, 1, 32>}, {pipeline_mode = #tpu.pipeline_mode<synchronous>, transform_indices = @transform_9, window_bounds = array<i64: 2, 1, 32>}, {pipeline_mode = #tpu.pipeline_mode<synchronous>, transform_indices = @transform_10, window_bounds = array<i64: 2, 32, 64>}, {pipeline_mode = #tpu.pipeline_mode<synchronous>, transform_indices = @transform_11, window_bounds = array<i64: 2, 1, 64>}, {pipeline_mode = #tpu.pipeline_mode<synchronous>, transform_indices = @transform_12, window_bounds = array<i64: 2, 64, 32>}, {pipeline_mode = #tpu.pipeline_mode<synchronous>, transform_indices = @transform_13, window_bounds = array<i64: 2, 1, 32>}, {pipeline_mode = #tpu.pipeline_mode<synchronous>, transform_indices = @transform_14, window_bounds = array<i64: 2, 1, 32>}, {pipeline_mode = #tpu.pipeline_mode<synchronous>, transform_indices = @transform_15, window_bounds = array<i64: 2, 1, 32>}, {pipeline_mode = #tpu.pipeline_mode<synchronous>, transform_indices = @transform_16, window_bounds = array<i64: 32, 32>}, {pipeline_mode = #tpu.pipeline_mode<synchronous>, transform_indices = @transform_17, window_bounds = array<i64: 1, 32>}, {pipeline_mode = #tpu.pipeline_mode<synchronous>, transform_indices = @transform_18, window_bounds = array<i64: 32, 3>}, {pipeline_mode = #tpu.pipeline_mode<synchronous>, transform_indices = @transform_19, window_bounds = array<i64: 1, 3>}, {transform_indices = @transform_20, window_bounds = array<i64: 1, 1, 3>}]} {
    %c0 = arith.constant 0 : index
    %c0_0 = arith.constant 0 : index
    %0 = vector.load %arg1[%c0, %c0_0] : memref<8x32xf32, #tpu.memory_space<vmem>>, vector<8x32xf32>
    %c0_1 = arith.constant 0 : index
    %c0_2 = arith.constant 0 : index
    %1 = vector.load %arg3[%c0_1, %c0_2] : memref<1x32xf32, #tpu.memory_space<vmem>>, vector<1x32xf32>
    %c0_3 = arith.constant 0 : index
    %c0_4 = arith.constant 0 : index
    %2 = vector.load %arg4[%c0_3, %c0_4] : memref<1x32xf32, #tpu.memory_space<vmem>>, vector<1x32xf32>
    %cst = arith.constant dense<0.000000e+00> : vector<8xf32>
    %3 = vector.multi_reduction <add>, %0, %cst [1] : vector<8x32xf32> to vector<8xf32>
    %4 = vector.shape_cast %3 : vector<8xf32> to vector<8x1xf32>
    %cst_5 = arith.constant 3.200000e+01 : f32
    %5 = vector.broadcast %cst_5 : f32 to vector<8x1xf32>
    %6 = arith.divf %4, %5 : vector<8x1xf32>
    %7 = vector.broadcast %6 : vector<8x1xf32> to vector<8x32xf32>
    %8 = arith.subf %0, %7 : vector<8x32xf32>
    %9 = arith.mulf %8, %8 : vector<8x32xf32>
    %cst_6 = arith.constant dense<0.000000e+00> : vector<8xf32>
    %10 = vector.multi_reduction <add>, %9, %cst_6 [1] : vector<8x32xf32> to vector<8xf32>
    %11 = vector.shape_cast %10 : vector<8xf32> to vector<8x1xf32>
    %cst_7 = arith.constant 3.200000e+01 : f32
    %12 = vector.broadcast %cst_7 : f32 to vector<8x1xf32>
    %13 = arith.divf %11, %12 : vector<8x1xf32>
    %cst_8 = arith.constant 9.99999996E-13 : f32
    %14 = vector.broadcast %cst_8 : f32 to vector<8x1xf32>
    %15 = arith.addf %13, %14 : vector<8x1xf32>
    %16 = math.rsqrt %15 : vector<8x1xf32>
    %17 = vector.broadcast %16 : vector<8x1xf32> to vector<8x32xf32>
    %18 = arith.mulf %8, %17 : vector<8x32xf32>
    %19 = vector.broadcast %1 : vector<1x32xf32> to vector<8x32xf32>
    %20 = arith.mulf %18, %19 : vector<8x32xf32>
    %21 = vector.broadcast %2 : vector<1x32xf32> to vector<8x32xf32>
    %22 = arith.addf %20, %21 : vector<8x32xf32>
    %c0_9 = arith.constant 0 : index
    %c0_10 = arith.constant 0 : index
    %c0_11 = arith.constant 0 : index
    %23 = vector.load %arg2[%c0_9, %c0_10, %c0_11] : memref<1x1x8xf32, #tpu.memory_space<vmem>>, vector<1x1x8xf32>
    %24 = vector.shape_cast %23 : vector<1x1x8xf32> to vector<1x8xf32>
    %cst_12 = arith.constant 1.000000e+00 : f32
    %25 = vector.broadcast %cst_12 : f32 to vector<1x8xf32>
    %26 = arith.subf %25, %24 : vector<1x8xf32>
    %cst_13 = arith.constant -1.000000e+09 : f32
    %27 = vector.broadcast %cst_13 : f32 to vector<1x8xf32>
    %28 = arith.mulf %26, %27 : vector<1x8xf32>
    %c0_i32 = arith.constant 0 : i32
    %c2_i32 = arith.constant 2 : i32
    %29 = arith.addi %c0_i32, %c2_i32 : i32
    %c1_i32 = arith.constant 1 : i32
    %30 = scf.for %arg22 = %c0_i32 to %29 step %c1_i32 iter_args(%arg23 = %22) -> (vector<8x32xf32>)  : i32 {
      %55 = arith.truncf %arg23 : vector<8x32xf32> to vector<8x32xbf16>
      %56 = arith.index_cast %arg22 : i32 to index
      %c0_30 = arith.constant 0 : index
      %c0_31 = arith.constant 0 : index
      %57 = vector.load %arg5[%56, %c0_30, %c0_31] : memref<2x32x96xbf16, #tpu.memory_space<vmem>>, vector<1x32x96xbf16>
      %58 = vector.shape_cast %57 : vector<1x32x96xbf16> to vector<32x96xbf16>
      %cst_32 = arith.constant dense<0.000000e+00> : vector<8x96xf32>
      %59 = tpu.matmul %55, %58, %cst_32 {dimension_numbers = #tpu.dot_dimension_numbers<[1], [0], [0], [1], [0, 0, 1, 1], [], []>} : vector<8x32xbf16>, vector<32x96xbf16>, vector<8x96xf32> -> vector<8x96xf32>
      %60 = arith.index_cast %arg22 : i32 to index
      %c0_33 = arith.constant 0 : index
      %c0_34 = arith.constant 0 : index
      %61 = vector.load %arg6[%60, %c0_33, %c0_34] : memref<2x1x96xf32, #tpu.memory_space<vmem>>, vector<1x1x96xf32>
      %62 = vector.shape_cast %61 : vector<1x1x96xf32> to vector<1x96xf32>
      %63 = vector.broadcast %62 : vector<1x96xf32> to vector<8x96xf32>
      %64 = arith.addf %59, %63 : vector<8x96xf32>
      %65 = arith.truncf %64 : vector<8x96xf32> to vector<8x96xbf16>
      %66 = arith.index_cast %arg22 : i32 to index
      %c0_35 = arith.constant 0 : index
      %c0_36 = arith.constant 0 : index
      %67 = vector.load %arg7[%66, %c0_35, %c0_36] : memref<2x32x32xbf16, #tpu.memory_space<vmem>>, vector<1x32x32xbf16>
      %68 = vector.shape_cast %67 : vector<1x32x32xbf16> to vector<32x32xbf16>
      %cst_37 = arith.constant 0.000000e+00 : f32
      %69 = vector.broadcast %cst_37 : f32 to vector<8x32xf32>
      %70 = vector.extract_strided_slice %65 {offsets = [0, 0], sizes = [8, 16], strides = [1, 1]} : vector<8x96xbf16> to vector<8x16xbf16>
      %71 = vector.extract_strided_slice %65 {offsets = [0, 32], sizes = [8, 16], strides = [1, 1]} : vector<8x96xbf16> to vector<8x16xbf16>
      %72 = vector.extract_strided_slice %65 {offsets = [0, 64], sizes = [8, 16], strides = [1, 1]} : vector<8x96xbf16> to vector<8x16xbf16>
      %cst_38 = arith.constant dense<0.000000e+00> : vector<8x8xf32>
      %73 = tpu.matmul %70, %71, %cst_38 {dimension_numbers = #tpu.dot_dimension_numbers<[1], [1], [0], [0], [0, 0, 1, 0], [], []>} : vector<8x16xbf16>, vector<8x16xbf16>, vector<8x8xf32> -> vector<8x8xf32>
      %cst_39 = arith.constant 2.500000e-01 : f32
      %74 = vector.broadcast %cst_39 : f32 to vector<8x8xf32>
      %75 = arith.mulf %73, %74 : vector<8x8xf32>
      %76 = vector.broadcast %28 : vector<1x8xf32> to vector<8x8xf32>
      %77 = arith.addf %75, %76 : vector<8x8xf32>
      %cst_40 = arith.constant dense<0xFF800000> : vector<8xf32>
      %78 = vector.multi_reduction <maximumf>, %77, %cst_40 [1] : vector<8x8xf32> to vector<8xf32>
      %79 = vector.shape_cast %78 : vector<8xf32> to vector<8x1xf32>
      %80 = vector.broadcast %79 : vector<8x1xf32> to vector<8x8xf32>
      %81 = arith.subf %77, %80 : vector<8x8xf32>
      %82 = math.exp %81 : vector<8x8xf32>
      %cst_41 = arith.constant dense<0.000000e+00> : vector<8xf32>
      %83 = vector.multi_reduction <add>, %82, %cst_41 [1] : vector<8x8xf32> to vector<8xf32>
      %84 = vector.shape_cast %83 : vector<8xf32> to vector<8x1xf32>
      %85 = tpu.reciprocal %84 {approx = true} : vector<8x1xf32> -> vector<8x1xf32>
      %86 = vector.broadcast %85 : vector<8x1xf32> to vector<8x8xf32>
      %87 = arith.mulf %82, %86 : vector<8x8xf32>
      %88 = arith.truncf %87 : vector<8x8xf32> to vector<8x8xbf16>
      %cst_42 = arith.constant dense<0.000000e+00> : vector<8x16xf32>
      %89 = tpu.matmul %88, %72, %cst_42 {dimension_numbers = #tpu.dot_dimension_numbers<[1], [0], [0], [1], [0, 0, 1, 1], [], []>} : vector<8x8xbf16>, vector<8x16xbf16>, vector<8x16xf32> -> vector<8x16xf32>
      %90 = arith.truncf %89 : vector<8x16xf32> to vector<8x16xbf16>
      %91 = vector.extract_strided_slice %68 {offsets = [0, 0], sizes = [16, 32], strides = [1, 1]} : vector<32x32xbf16> to vector<16x32xbf16>
      %cst_43 = arith.constant dense<0.000000e+00> : vector<8x32xf32>
      %92 = tpu.matmul %90, %91, %cst_43 {dimension_numbers = #tpu.dot_dimension_numbers<[1], [0], [0], [1], [0, 0, 1, 1], [], []>} : vector<8x16xbf16>, vector<16x32xbf16>, vector<8x32xf32> -> vector<8x32xf32>
      %93 = arith.addf %69, %92 : vector<8x32xf32>
      %94 = vector.extract_strided_slice %65 {offsets = [0, 16], sizes = [8, 16], strides = [1, 1]} : vector<8x96xbf16> to vector<8x16xbf16>
      %95 = vector.extract_strided_slice %65 {offsets = [0, 48], sizes = [8, 16], strides = [1, 1]} : vector<8x96xbf16> to vector<8x16xbf16>
      %96 = vector.extract_strided_slice %65 {offsets = [0, 80], sizes = [8, 16], strides = [1, 1]} : vector<8x96xbf16> to vector<8x16xbf16>
      %cst_44 = arith.constant dense<0.000000e+00> : vector<8x8xf32>
      %97 = tpu.matmul %94, %95, %cst_44 {dimension_numbers = #tpu.dot_dimension_numbers<[1], [1], [0], [0], [0, 0, 1, 0], [], []>} : vector<8x16xbf16>, vector<8x16xbf16>, vector<8x8xf32> -> vector<8x8xf32>
      %cst_45 = arith.constant 2.500000e-01 : f32
      %98 = vector.broadcast %cst_45 : f32 to vector<8x8xf32>
      %99 = arith.mulf %97, %98 : vector<8x8xf32>
      %100 = vector.broadcast %28 : vector<1x8xf32> to vector<8x8xf32>
      %101 = arith.addf %99, %100 : vector<8x8xf32>
      %cst_46 = arith.constant dense<0xFF800000> : vector<8xf32>
      %102 = vector.multi_reduction <maximumf>, %101, %cst_46 [1] : vector<8x8xf32> to vector<8xf32>
      %103 = vector.shape_cast %102 : vector<8xf32> to vector<8x1xf32>
      %104 = vector.broadcast %103 : vector<8x1xf32> to vector<8x8xf32>
      %105 = arith.subf %101, %104 : vector<8x8xf32>
      %106 = math.exp %105 : vector<8x8xf32>
      %cst_47 = arith.constant dense<0.000000e+00> : vector<8xf32>
      %107 = vector.multi_reduction <add>, %106, %cst_47 [1] : vector<8x8xf32> to vector<8xf32>
      %108 = vector.shape_cast %107 : vector<8xf32> to vector<8x1xf32>
      %109 = tpu.reciprocal %108 {approx = true} : vector<8x1xf32> -> vector<8x1xf32>
      %110 = vector.broadcast %109 : vector<8x1xf32> to vector<8x8xf32>
      %111 = arith.mulf %106, %110 : vector<8x8xf32>
      %112 = arith.truncf %111 : vector<8x8xf32> to vector<8x8xbf16>
      %cst_48 = arith.constant dense<0.000000e+00> : vector<8x16xf32>
      %113 = tpu.matmul %112, %96, %cst_48 {dimension_numbers = #tpu.dot_dimension_numbers<[1], [0], [0], [1], [0, 0, 1, 1], [], []>} : vector<8x8xbf16>, vector<8x16xbf16>, vector<8x16xf32> -> vector<8x16xf32>
      %114 = arith.truncf %113 : vector<8x16xf32> to vector<8x16xbf16>
      %115 = vector.extract_strided_slice %68 {offsets = [16, 0], sizes = [16, 32], strides = [1, 1]} : vector<32x32xbf16> to vector<16x32xbf16>
      %cst_49 = arith.constant dense<0.000000e+00> : vector<8x32xf32>
      %116 = tpu.matmul %114, %115, %cst_49 {dimension_numbers = #tpu.dot_dimension_numbers<[1], [0], [0], [1], [0, 0, 1, 1], [], []>} : vector<8x16xbf16>, vector<16x32xbf16>, vector<8x32xf32> -> vector<8x32xf32>
      %117 = arith.addf %93, %116 : vector<8x32xf32>
      %118 = arith.index_cast %arg22 : i32 to index
      %c0_50 = arith.constant 0 : index
      %c0_51 = arith.constant 0 : index
      %119 = vector.load %arg8[%118, %c0_50, %c0_51] : memref<2x1x32xf32, #tpu.memory_space<vmem>>, vector<1x1x32xf32>
      %120 = vector.shape_cast %119 : vector<1x1x32xf32> to vector<1x32xf32>
      %121 = vector.broadcast %120 : vector<1x32xf32> to vector<8x32xf32>
      %122 = arith.addf %117, %121 : vector<8x32xf32>
      %123 = arith.addf %122, %arg23 : vector<8x32xf32>
      %124 = arith.index_cast %arg22 : i32 to index
      %c0_52 = arith.constant 0 : index
      %c0_53 = arith.constant 0 : index
      %125 = vector.load %arg9[%124, %c0_52, %c0_53] : memref<2x1x32xf32, #tpu.memory_space<vmem>>, vector<1x1x32xf32>
      %126 = vector.shape_cast %125 : vector<1x1x32xf32> to vector<1x32xf32>
      %127 = arith.index_cast %arg22 : i32 to index
      %c0_54 = arith.constant 0 : index
      %c0_55 = arith.constant 0 : index
      %128 = vector.load %arg10[%127, %c0_54, %c0_55] : memref<2x1x32xf32, #tpu.memory_space<vmem>>, vector<1x1x32xf32>
      %129 = vector.shape_cast %128 : vector<1x1x32xf32> to vector<1x32xf32>
      %cst_56 = arith.constant dense<0.000000e+00> : vector<8xf32>
      %130 = vector.multi_reduction <add>, %123, %cst_56 [1] : vector<8x32xf32> to vector<8xf32>
      %131 = vector.shape_cast %130 : vector<8xf32> to vector<8x1xf32>
      %cst_57 = arith.constant 3.200000e+01 : f32
      %132 = vector.broadcast %cst_57 : f32 to vector<8x1xf32>
      %133 = arith.divf %131, %132 : vector<8x1xf32>
      %134 = vector.broadcast %133 : vector<8x1xf32> to vector<8x32xf32>
      %135 = arith.subf %123, %134 : vector<8x32xf32>
      %136 = arith.mulf %135, %135 : vector<8x32xf32>
      %cst_58 = arith.constant dense<0.000000e+00> : vector<8xf32>
      %137 = vector.multi_reduction <add>, %136, %cst_58 [1] : vector<8x32xf32> to vector<8xf32>
      %138 = vector.shape_cast %137 : vector<8xf32> to vector<8x1xf32>
      %cst_59 = arith.constant 3.200000e+01 : f32
      %139 = vector.broadcast %cst_59 : f32 to vector<8x1xf32>
      %140 = arith.divf %138, %139 : vector<8x1xf32>
      %cst_60 = arith.constant 9.99999996E-13 : f32
      %141 = vector.broadcast %cst_60 : f32 to vector<8x1xf32>
      %142 = arith.addf %140, %141 : vector<8x1xf32>
      %143 = math.rsqrt %142 : vector<8x1xf32>
      %144 = vector.broadcast %143 : vector<8x1xf32> to vector<8x32xf32>
      %145 = arith.mulf %135, %144 : vector<8x32xf32>
      %146 = vector.broadcast %126 : vector<1x32xf32> to vector<8x32xf32>
      %147 = arith.mulf %145, %146 : vector<8x32xf32>
      %148 = vector.broadcast %129 : vector<1x32xf32> to vector<8x32xf32>
      %149 = arith.addf %147, %148 : vector<8x32xf32>
      %150 = arith.truncf %149 : vector<8x32xf32> to vector<8x32xbf16>
      %151 = arith.index_cast %arg22 : i32 to index
      %c0_61 = arith.constant 0 : index
      %c0_62 = arith.constant 0 : index
      %152 = vector.load %arg11[%151, %c0_61, %c0_62] : memref<2x32x64xbf16, #tpu.memory_space<vmem>>, vector<1x32x64xbf16>
      %153 = vector.shape_cast %152 : vector<1x32x64xbf16> to vector<32x64xbf16>
      %cst_63 = arith.constant dense<0.000000e+00> : vector<8x64xf32>
      %154 = tpu.matmul %150, %153, %cst_63 {dimension_numbers = #tpu.dot_dimension_numbers<[1], [0], [0], [1], [0, 0, 1, 1], [], []>} : vector<8x32xbf16>, vector<32x64xbf16>, vector<8x64xf32> -> vector<8x64xf32>
      %155 = arith.index_cast %arg22 : i32 to index
      %c0_64 = arith.constant 0 : index
      %c0_65 = arith.constant 0 : index
      %156 = vector.load %arg12[%155, %c0_64, %c0_65] : memref<2x1x64xf32, #tpu.memory_space<vmem>>, vector<1x1x64xf32>
      %157 = vector.shape_cast %156 : vector<1x1x64xf32> to vector<1x64xf32>
      %158 = vector.broadcast %157 : vector<1x64xf32> to vector<8x64xf32>
      %159 = arith.addf %154, %158 : vector<8x64xf32>
      %cst_66 = arith.constant 5.000000e-01 : f32
      %160 = vector.broadcast %cst_66 : f32 to vector<8x64xf32>
      %161 = arith.mulf %160, %159 : vector<8x64xf32>
      %cst_67 = arith.constant 0.707106769 : f32
      %162 = vector.broadcast %cst_67 : f32 to vector<8x64xf32>
      %163 = arith.mulf %159, %162 : vector<8x64xf32>
      %164 = math.erf %163 : vector<8x64xf32>
      %cst_68 = arith.constant 1.000000e+00 : f32
      %165 = vector.broadcast %cst_68 : f32 to vector<8x64xf32>
      %166 = arith.addf %165, %164 : vector<8x64xf32>
      %167 = arith.mulf %161, %166 : vector<8x64xf32>
      %168 = arith.truncf %167 : vector<8x64xf32> to vector<8x64xbf16>
      %169 = arith.index_cast %arg22 : i32 to index
      %c0_69 = arith.constant 0 : index
      %c0_70 = arith.constant 0 : index
      %170 = vector.load %arg13[%169, %c0_69, %c0_70] : memref<2x64x32xbf16, #tpu.memory_space<vmem>>, vector<1x64x32xbf16>
      %171 = vector.shape_cast %170 : vector<1x64x32xbf16> to vector<64x32xbf16>
      %cst_71 = arith.constant dense<0.000000e+00> : vector<8x32xf32>
      %172 = tpu.matmul %168, %171, %cst_71 {dimension_numbers = #tpu.dot_dimension_numbers<[1], [0], [0], [1], [0, 0, 1, 1], [], []>} : vector<8x64xbf16>, vector<64x32xbf16>, vector<8x32xf32> -> vector<8x32xf32>
      %173 = arith.index_cast %arg22 : i32 to index
      %c0_72 = arith.constant 0 : index
      %c0_73 = arith.constant 0 : index
      %174 = vector.load %arg14[%173, %c0_72, %c0_73] : memref<2x1x32xf32, #tpu.memory_space<vmem>>, vector<1x1x32xf32>
      %175 = vector.shape_cast %174 : vector<1x1x32xf32> to vector<1x32xf32>
      %176 = vector.broadcast %175 : vector<1x32xf32> to vector<8x32xf32>
      %177 = arith.addf %172, %176 : vector<8x32xf32>
      %178 = arith.addf %177, %149 : vector<8x32xf32>
      %179 = arith.index_cast %arg22 : i32 to index
      %c0_74 = arith.constant 0 : index
      %c0_75 = arith.constant 0 : index
      %180 = vector.load %arg15[%179, %c0_74, %c0_75] : memref<2x1x32xf32, #tpu.memory_space<vmem>>, vector<1x1x32xf32>
      %181 = vector.shape_cast %180 : vector<1x1x32xf32> to vector<1x32xf32>
      %182 = arith.index_cast %arg22 : i32 to index
      %c0_76 = arith.constant 0 : index
      %c0_77 = arith.constant 0 : index
      %183 = vector.load %arg16[%182, %c0_76, %c0_77] : memref<2x1x32xf32, #tpu.memory_space<vmem>>, vector<1x1x32xf32>
      %184 = vector.shape_cast %183 : vector<1x1x32xf32> to vector<1x32xf32>
      %cst_78 = arith.constant dense<0.000000e+00> : vector<8xf32>
      %185 = vector.multi_reduction <add>, %178, %cst_78 [1] : vector<8x32xf32> to vector<8xf32>
      %186 = vector.shape_cast %185 : vector<8xf32> to vector<8x1xf32>
      %cst_79 = arith.constant 3.200000e+01 : f32
      %187 = vector.broadcast %cst_79 : f32 to vector<8x1xf32>
      %188 = arith.divf %186, %187 : vector<8x1xf32>
      %189 = vector.broadcast %188 : vector<8x1xf32> to vector<8x32xf32>
      %190 = arith.subf %178, %189 : vector<8x32xf32>
      %191 = arith.mulf %190, %190 : vector<8x32xf32>
      %cst_80 = arith.constant dense<0.000000e+00> : vector<8xf32>
      %192 = vector.multi_reduction <add>, %191, %cst_80 [1] : vector<8x32xf32> to vector<8xf32>
      %193 = vector.shape_cast %192 : vector<8xf32> to vector<8x1xf32>
      %cst_81 = arith.constant 3.200000e+01 : f32
      %194 = vector.broadcast %cst_81 : f32 to vector<8x1xf32>
      %195 = arith.divf %193, %194 : vector<8x1xf32>
      %cst_82 = arith.constant 9.99999996E-13 : f32
      %196 = vector.broadcast %cst_82 : f32 to vector<8x1xf32>
      %197 = arith.addf %195, %196 : vector<8x1xf32>
      %198 = math.rsqrt %197 : vector<8x1xf32>
      %199 = vector.broadcast %198 : vector<8x1xf32> to vector<8x32xf32>
      %200 = arith.mulf %190, %199 : vector<8x32xf32>
      %201 = vector.broadcast %181 : vector<1x32xf32> to vector<8x32xf32>
      %202 = arith.mulf %200, %201 : vector<8x32xf32>
      %203 = vector.broadcast %184 : vector<1x32xf32> to vector<8x32xf32>
      %204 = arith.addf %202, %203 : vector<8x32xf32>
      scf.yield %204 : vector<8x32xf32>
    }
    %c2_i32_14 = arith.constant 2 : i32
    %31 = vector.extract_strided_slice %30 {offsets = [0, 0], sizes = [1, 32], strides = [1, 1]} : vector<8x32xf32> to vector<1x32xf32>
    %32 = arith.truncf %31 : vector<1x32xf32> to vector<1x32xbf16>
    %c0_15 = arith.constant 0 : index
    %c0_16 = arith.constant 0 : index
    %33 = vector.load %arg17[%c0_15, %c0_16] : memref<32x32xbf16, #tpu.memory_space<vmem>>, vector<32x32xbf16>
    %cst_17 = arith.constant dense<0.000000e+00> : vector<1x32xf32>
    %34 = tpu.matmul %32, %33, %cst_17 {dimension_numbers = #tpu.dot_dimension_numbers<[1], [0], [0], [1], [0, 0, 1, 1], [], []>} : vector<1x32xbf16>, vector<32x32xbf16>, vector<1x32xf32> -> vector<1x32xf32>
    %c0_18 = arith.constant 0 : index
    %c0_19 = arith.constant 0 : index
    %35 = vector.load %arg18[%c0_18, %c0_19] : memref<1x32xf32, #tpu.memory_space<vmem>>, vector<1x32xf32>
    %36 = arith.addf %34, %35 : vector<1x32xf32>
    %37 = math.tanh %36 : vector<1x32xf32>
    %38 = arith.truncf %37 : vector<1x32xf32> to vector<1x32xbf16>
    %c0_20 = arith.constant 0 : index
    %c0_21 = arith.constant 0 : index
    %39 = vector.load %arg19[%c0_20, %c0_21] : memref<32x3xbf16, #tpu.memory_space<vmem>>, vector<32x3xbf16>
    %cst_22 = arith.constant dense<0.000000e+00> : vector<1x3xf32>
    %40 = tpu.matmul %38, %39, %cst_22 {dimension_numbers = #tpu.dot_dimension_numbers<[1], [0], [0], [1], [0, 0, 1, 1], [], []>} : vector<1x32xbf16>, vector<32x3xbf16>, vector<1x3xf32> -> vector<1x3xf32>
    %c0_23 = arith.constant 0 : index
    %c0_24 = arith.constant 0 : index
    %41 = vector.load %arg20[%c0_23, %c0_24] : memref<1x3xf32, #tpu.memory_space<vmem>>, vector<1x3xf32>
    %42 = arith.addf %40, %41 : vector<1x3xf32>
    %cst_25 = arith.constant dense<0xFF800000> : vector<1xf32>
    %43 = vector.multi_reduction <maximumf>, %42, %cst_25 [1] : vector<1x3xf32> to vector<1xf32>
    %44 = vector.shape_cast %43 : vector<1xf32> to vector<1x1xf32>
    %45 = vector.broadcast %44 : vector<1x1xf32> to vector<1x3xf32>
    %46 = arith.subf %42, %45 : vector<1x3xf32>
    %47 = math.exp %46 : vector<1x3xf32>
    %cst_26 = arith.constant dense<0.000000e+00> : vector<1xf32>
    %48 = vector.multi_reduction <add>, %47, %cst_26 [1] : vector<1x3xf32> to vector<1xf32>
    %49 = vector.shape_cast %48 : vector<1xf32> to vector<1x1xf32>
    %50 = vector.broadcast %49 : vector<1x1xf32> to vector<1x3xf32>
    %51 = arith.divf %47, %50 : vector<1x3xf32>
    %c0_27 = arith.constant 0 : index
    %c0_28 = arith.constant 0 : index
    %c0_29 = arith.constant 0 : index
    %52 = vector.load %arg21[%c0_27, %c0_28, %c0_29] : memref<1x1x3xf32, #tpu.memory_space<vmem>>, vector<1x1x3xf32>
    %53 = vector.shape_cast %52 : vector<1x1x3xf32> to vector<1x3xf32>
    %54 = vector.shape_cast %51 : vector<1x3xf32> to vector<1x1x3xf32>
    tpu.vector_store %arg21[%c0_27, %c0_28, %c0_29], %54 {strides = array<i32>} : memref<1x1x3xf32, #tpu.memory_space<vmem>>, vector<1x1x3xf32>,
    return
  }
  func.func @transform_0(%arg0: i32) -> (i32, i32) {
    %c0_i32 = arith.constant 0 : i32
    %c0_i32_0 = arith.constant 0 : i32
    return %arg0, %c0_i32 : i32, i32
  }
  func.func @transform_1(%arg0: i32) -> (i32, i32, i32) {
    %c0_i32 = arith.constant 0 : i32
    %c0_i32_0 = arith.constant 0 : i32
    %c0_i32_1 = arith.constant 0 : i32
    return %arg0, %c0_i32, %c0_i32_0 : i32, i32, i32
  }
  func.func @transform_2(%arg0: i32) -> (i32, i32) {
    %c0_i32 = arith.constant 0 : i32
    %c0_i32_0 = arith.constant 0 : i32
    %c0_i32_1 = arith.constant 0 : i32
    return %c0_i32, %c0_i32_0 : i32, i32
  }
  func.func @transform_3(%arg0: i32) -> (i32, i32) {
    %c0_i32 = arith.constant 0 : i32
    %c0_i32_0 = arith.constant 0 : i32
    %c0_i32_1 = arith.constant 0 : i32
    return %c0_i32, %c0_i32_0 : i32, i32
  }
  func.func @transform_4(%arg0: i32) -> (i32, i32, i32) {
    %c0_i32 = arith.constant 0 : i32
    %c0_i32_0 = arith.constant 0 : i32
    %c0_i32_1 = arith.constant 0 : i32
    %c0_i32_2 = arith.constant 0 : i32
    return %c0_i32, %c0_i32_0, %c0_i32_1 : i32, i32, i32
  }
  func.func @transform_5(%arg0: i32) -> (i32, i32, i32) {
    %c0_i32 = arith.constant 0 : i32
    %c0_i32_0 = arith.constant 0 : i32
    %c0_i32_1 = arith.constant 0 : i32
    %c0_i32_2 = arith.constant 0 : i32
    return %c0_i32, %c0_i32_0, %c0_i32_1 : i32, i32, i32
  }
  func.func @transform_6(%arg0: i32) -> (i32, i32, i32) {
    %c0_i32 = arith.constant 0 : i32
    %c0_i32_0 = arith.constant 0 : i32
    %c0_i32_1 = arith.constant 0 : i32
    %c0_i32_2 = arith.constant 0 : i32
    return %c0_i32, %c0_i32_0, %c0_i32_1 : i32, i32, i32
  }
  func.func @transform_7(%arg0: i32) -> (i32, i32, i32) {
    %c0_i32 = arith.constant 0 : i32
    %c0_i32_0 = arith.constant 0 : i32
    %c0_i32_1 = arith.constant 0 : i32
    %c0_i32_2 = arith.constant 0 : i32
    return %c0_i32, %c0_i32_0, %c0_i32_1 : i32, i32, i32
  }
  func.func @transform_8(%arg0: i32) -> (i32, i32, i32) {
    %c0_i32 = arith.constant 0 : i32
    %c0_i32_0 = arith.constant 0 : i32
    %c0_i32_1 = arith.constant 0 : i32
    %c0_i32_2 = arith.constant 0 : i32
    return %c0_i32, %c0_i32_0, %c0_i32_1 : i32, i32, i32
  }
  func.func @transform_9(%arg0: i32) -> (i32, i32, i32) {
    %c0_i32 = arith.constant 0 : i32
    %c0_i32_0 = arith.constant 0 : i32
    %c0_i32_1 = arith.constant 0 : i32
    %c0_i32_2 = arith.constant 0 : i32
    return %c0_i32, %c0_i32_0, %c0_i32_1 : i32, i32, i32
  }
  func.func @transform_10(%arg0: i32) -> (i32, i32, i32) {
    %c0_i32 = arith.constant 0 : i32
    %c0_i32_0 = arith.constant 0 : i32
    %c0_i32_1 = arith.constant 0 : i32
    %c0_i32_2 = arith.constant 0 : i32
    return %c0_i32, %c0_i32_0, %c0_i32_1 : i32, i32, i32
  }
  func.func @transform_11(%arg0: i32) -> (i32, i32, i32) {
    %c0_i32 = arith.constant 0 : i32
    %c0_i32_0 = arith.constant 0 : i32
    %c0_i32_1 = arith.constant 0 : i32
    %c0_i32_2 = arith.constant 0 : i32
    return %c0_i32, %c0_i32_0, %c0_i32_1 : i32, i32, i32
  }
  func.func @transform_12(%arg0: i32) -> (i32, i32, i32) {
    %c0_i32 = arith.constant 0 : i32
    %c0_i32_0 = arith.constant 0 : i32
    %c0_i32_1 = arith.constant 0 : i32
    %c0_i32_2 = arith.constant 0 : i32
    return %c0_i32, %c0_i32_0, %c0_i32_1 : i32, i32, i32
  }
  func.func @transform_13(%arg0: i32) -> (i32, i32, i32) {
    %c0_i32 = arith.constant 0 : i32
    %c0_i32_0 = arith.constant 0 : i32
    %c0_i32_1 = arith.constant 0 : i32
    %c0_i32_2 = arith.constant 0 : i32
    return %c0_i32, %c0_i32_0, %c0_i32_1 : i32, i32, i32
  }
  func.func @transform_14(%arg0: i32) -> (i32, i32, i32) {
    %c0_i32 = arith.constant 0 : i32
    %c0_i32_0 = arith.constant 0 : i32
    %c0_i32_1 = arith.constant 0 : i32
    %c0_i32_2 = arith.constant 0 : i32
    return %c0_i32, %c0_i32_0, %c0_i32_1 : i32, i32, i32
  }
  func.func @transform_15(%arg0: i32) -> (i32, i32, i32) {
    %c0_i32 = arith.constant 0 : i32
    %c0_i32_0 = arith.constant 0 : i32
    %c0_i32_1 = arith.constant 0 : i32
    %c0_i32_2 = arith.constant 0 : i32
    return %c0_i32, %c0_i32_0, %c0_i32_1 : i32, i32, i32
  }
  func.func @transform_16(%arg0: i32) -> (i32, i32) {
    %c0_i32 = arith.constant 0 : i32
    %c0_i32_0 = arith.constant 0 : i32
    %c0_i32_1 = arith.constant 0 : i32
    return %c0_i32, %c0_i32_0 : i32, i32
  }
  func.func @transform_17(%arg0: i32) -> (i32, i32) {
    %c0_i32 = arith.constant 0 : i32
    %c0_i32_0 = arith.constant 0 : i32
    %c0_i32_1 = arith.constant 0 : i32
    return %c0_i32, %c0_i32_0 : i32, i32
  }
  func.func @transform_18(%arg0: i32) -> (i32, i32) {
    %c0_i32 = arith.constant 0 : i32
    %c0_i32_0 = arith.constant 0 : i32
    %c0_i32_1 = arith.constant 0 : i32
    return %c0_i32, %c0_i32_0 : i32, i32
  }
  func.func @transform_19(%arg0: i32) -> (i32, i32) {
    %c0_i32 = arith.constant 0 : i32
    %c0_i32_0 = arith.constant 0 : i32
    %c0_i32_1 = arith.constant 0 : i32
    return %c0_i32, %c0_i32_0 : i32, i32
  }
  func.func @transform_20(%arg0: i32) -> (i32, i32, i32) {
    %c0_i32 = arith.constant 0 : i32
    %c0_i32_0 = arith.constant 0 : i32
    %c0_i32_1 = arith.constant 0 : i32
    return %arg0, %c0_i32, %c0_i32_0 : i32, i32, i32
  }
}

</mosaic_0001>

<llo_original>
// kernel: bert_classifier_forward.1
$region0: #{bert_classifier_forward.1}
  #allocation0 [shape = 'u32[]', space=smem, size = 0x4, offset = 0x4, fixed_abs, tag = 'smem constant byte address 0x4 - core index']
  #allocation1 [shape = 'u32[144,128]{1,0:T(1,128)}', space=vmem, size = 0x12000, scoped, tag = 'internal scratch']
  %s0 = inlined_call_operand.vmem [shape: f32[16,32], index: 0, kind: input, shape index: {}]
  %s1 = inlined_call_operand.vmem [shape: f32[2,1,8], index: 1, kind: input, shape index: {}]
  %s2 = inlined_call_operand.vmem [shape: f32[1,32], index: 2, kind: input, shape index: {}]
  %s3 = inlined_call_operand.vmem [shape: f32[1,32], index: 3, kind: input, shape index: {}]
  %s4 = inlined_call_operand.vmem [shape: bf16[2,32,96], index: 4, kind: input, shape index: {}]
  %s5 = inlined_call_operand.vmem [shape: f32[2,1,96], index: 5, kind: input, shape index: {}]
  %s6 = inlined_call_operand.vmem [shape: bf16[2,32,32], index: 6, kind: input, shape index: {}]
  %s7 = inlined_call_operand.vmem [shape: f32[2,1,32], index: 7, kind: input, shape index: {}]
  %s8 = inlined_call_operand.vmem [shape: f32[2,1,32], index: 8, kind: input, shape index: {}]
  %s9 = inlined_call_operand.vmem [shape: f32[2,1,32], index: 9, kind: input, shape index: {}]
  %s10 = inlined_call_operand.vmem [shape: bf16[2,32,64], index: 10, kind: input, shape index: {}]
  %s11 = inlined_call_operand.vmem [shape: f32[2,1,64], index: 11, kind: input, shape index: {}]
  %s12 = inlined_call_operand.vmem [shape: bf16[2,64,32], index: 12, kind: input, shape index: {}]
  %s13 = inlined_call_operand.vmem [shape: f32[2,1,32], index: 13, kind: input, shape index: {}]
  %s14 = inlined_call_operand.vmem [shape: f32[2,1,32], index: 14, kind: input, shape index: {}]
  %s15 = inlined_call_operand.vmem [shape: f32[2,1,32], index: 15, kind: input, shape index: {}]
  %s16 = inlined_call_operand.vmem [shape: bf16[32,32], index: 16, kind: input, shape index: {}]
  %s17 = inlined_call_operand.vmem [shape: f32[1,32], index: 17, kind: input, shape index: {}]
  %s18 = inlined_call_operand.vmem [shape: bf16[32,3], index: 18, kind: input, shape index: {}]
  %s19 = inlined_call_operand.vmem [shape: f32[1,3], index: 19, kind: input, shape index: {}]
  %s20 = inlined_call_operand.hbm [shape: f32[2,1,3], index: 20, kind: output, shape index: {}]
  %s21 = sld [smem:[#allocation0]]
  $region120: #{bert_classifier_forward.1} parent=0
    _
  %s23 = ssub.s32 1, %s21
  %s24 = scalar_select 0, %s23, %s21
  $region1: #{bert_classifier_forward.1} parent=0
    #allocation2 [shape = 'u8[1024]{0}', space=vmem, size = 0x400, scoped, tag = 'output window, operand 0']
    #allocation3 [shape = 's32[2]{0}', space=sflag, size = 0x8, scoped, tag = 'scoped memory for bert_classifier_forward.1']
    %25 = vsyncpa [#allocation3], 0
    %s26 = scalar_lea.sflag [#allocation3], 1
    %27 = vsyncpa %s26, 0
    loop: start=0, step=1, limit=4
    $region2: #{bert_classifier_forward.1} parent=1 // loop_pre_header
      _
    $region3: #{bert_classifier_forward.1} parent=1 // loop_header
      %s29 = sphi 0, %s33
      %p30 = scmp.ge.s32.totalorder %s29, 4
      %s39 = sphi 0, %s41
      %s42 = sphi 0, %s39
      %s43 = sphi 0, %s42
      %s59 = sphi 0, %s43
      %s65 = sphi 0, %s67
      %s68 = sphi 0, %s65
      %s69 = sphi 0, %s68
      %s85 = sphi 0, %s69
      %s89 = sphi 0, %s89
      %s91 = sphi 0, %s89
      %s92 = sphi 0, %s91
      %s106 = sphi 0, %s92
      %s110 = sphi 0, %s110
      %s112 = sphi 0, %s110
      %s113 = sphi 0, %s112
      %s127 = sphi 0, %s113
      %s131 = sphi 0, %s131
      %s133 = sphi 0, %s131
      %s134 = sphi 0, %s133
      %s148 = sphi 0, %s134
      %s152 = sphi 0, %s152
      %s154 = sphi 0, %s152
      %s155 = sphi 0, %s154
      %s169 = sphi 0, %s155
      %s173 = sphi 0, %s173
      %s175 = sphi 0, %s173
      %s176 = sphi 0, %s175
      %s190 = sphi 0, %s176
      %s194 = sphi 0, %s194
      %s196 = sphi 0, %s194
      %s197 = sphi 0, %s196
      %s211 = sphi 0, %s197
      %s215 = sphi 0, %s215
      %s217 = sphi 0, %s215
      %s218 = sphi 0, %s217
      %s232 = sphi 0, %s218
      %s236 = sphi 0, %s236
      %s238 = sphi 0, %s236
      %s239 = sphi 0, %s238
      %s253 = sphi 0, %s239
      %s257 = sphi 0, %s257
      %s259 = sphi 0, %s257
      %s260 = sphi 0, %s259
      %s274 = sphi 0, %s260
      %s278 = sphi 0, %s278
      %s280 = sphi 0, %s278
      %s281 = sphi 0, %s280
      %s295 = sphi 0, %s281
      %s299 = sphi 0, %s299
      %s301 = sphi 0, %s299
      %s302 = sphi 0, %s301
      %s316 = sphi 0, %s302
      %s320 = sphi 0, %s320
      %s322 = sphi 0, %s320
      %s323 = sphi 0, %s322
      %s337 = sphi 0, %s323
      %s341 = sphi 0, %s341
      %s343 = sphi 0, %s341
      %s344 = sphi 0, %s343
      %s358 = sphi 0, %s344
      %s362 = sphi 0, %s362
      %s364 = sphi 0, %s362
      %s365 = sphi 0, %s364
      %s379 = sphi 0, %s365
      %s383 = sphi 0, %s383
      %s385 = sphi 0, %s383
      %s386 = sphi 0, %s385
      %s400 = sphi 0, %s386
      %s404 = sphi 0, %s404
      %s406 = sphi 0, %s404
      %s407 = sphi 0, %s406
      %s421 = sphi 0, %s407
      %s425 = sphi 0, %s425
      %s427 = sphi 0, %s425
      %s428 = sphi 0, %s427
      %s442 = sphi 0, %s428
      %s446 = sphi 0, %s446
      %s448 = sphi 0, %s446
      %s449 = sphi 0, %s448
      %s463 = sphi 0, %s449
      %s469 = sphi 0, %s471
      %s472 = sphi 0, %s469
      %s473 = sphi 0, %s472
      %s489 = sphi 0, %s473
    $region4: #{bert_classifier_forward.1} parent=1 // loop_header_branch
      %32 = sbr.rel (%p30) target = $region8
    $region5: #{bert_classifier_forward.1} parent=1 // loop_body
      %s34 = ssub.s32 %s29, 1
      %s35 = ssub.s32 %s29, 2
      %s36 = sadd.s32 %s29, 1
      %s37 = ssub.s32 %s29, %s36
      %p38 = scmp.eq.s32.totalorder %s37, 0
      %s40 = sadd.s32 %s39, 1
      %s41 = scalar_select %p38, %s39, %s40
      %p44 = pneg %p38
      %p45 = scmp.eq.s32.totalorder %s29, 1
      %p46 = por %p44, %p45
      %p47 = scmp.ne.s32.totalorder %s39, %s42
      %p48 = scmp.eq.s32.totalorder %s29, 0
      %p49 = por %p47, %p48
      %p50 = scmp.ne.s32.totalorder %s39, %s42
      %p51 = scmp.eq.s32.totalorder %s34, 1
      %p52 = por %p50, %p51
      %p53 = scmp.ne.s32.totalorder %s42, %s43
      %p54 = scmp.eq.s32.totalorder %s34, 0
      %p55 = por %p53, %p54
      %p56 = scmp.ne.s32.totalorder %s42, %s43
      %p57 = scmp.eq.s32.totalorder %s35, 1
      %p58 = por %p56, %p57
      %p60 = scmp.ne.s32.totalorder %s43, %s59
      %p61 = scmp.eq.s32.totalorder %s35, 0
      %p62 = por %p60, %p61
      %s63 = ssub.s32 %s29, %s36
      %p64 = scmp.eq.s32.totalorder %s63, 0
      %s66 = sadd.s32 %s65, 1
      %s67 = scalar_select %p64, %s65, %s66
      %p70 = pneg %p64
      %p71 = scmp.eq.s32.totalorder %s29, 1
      %p72 = por %p70, %p71
      %p73 = scmp.ne.s32.totalorder %s65, %s68
      %p74 = scmp.eq.s32.totalorder %s29, 0
      %p75 = por %p73, %p74
      %p76 = scmp.ne.s32.totalorder %s65, %s68
      %p77 = scmp.eq.s32.totalorder %s34, 1
      %p78 = por %p76, %p77
      %p79 = scmp.ne.s32.totalorder %s68, %s69
      %p80 = scmp.eq.s32.totalorder %s34, 0
      %p81 = por %p79, %p80
      %p82 = scmp.ne.s32.totalorder %s68, %s69
      %p83 = scmp.eq.s32.totalorder %s35, 1
      %p84 = por %p82, %p83
      %p86 = scmp.ne.s32.totalorder %s69, %s85
      %p87 = scmp.eq.s32.totalorder %s35, 0
      %p88 = por %p86, %p87
      %s90 = sadd.s32 %s89, 1
      %p93 = scmp.eq.s32.totalorder %s29, 1
      %p94 = scmp.ne.s32.totalorder %s89, %s91
      %p95 = scmp.eq.s32.totalorder %s29, 0
      %p96 = por %p94, %p95
      %p97 = scmp.ne.s32.totalorder %s89, %s91
      %p98 = scmp.eq.s32.totalorder %s34, 1
      %p99 = por %p97, %p98
      %p100 = scmp.ne.s32.totalorder %s91, %s92
      %p101 = scmp.eq.s32.totalorder %s34, 0
      %p102 = por %p100, %p101
      %p103 = scmp.ne.s32.totalorder %s91, %s92
      %p104 = scmp.eq.s32.totalorder %s35, 1
      %p105 = por %p103, %p104
      %p107 = scmp.ne.s32.totalorder %s92, %s106
      %p108 = scmp.eq.s32.totalorder %s35, 0
      %p109 = por %p107, %p108
      %s111 = sadd.s32 %s110, 1
      %p114 = scmp.eq.s32.totalorder %s29, 1
      %p115 = scmp.ne.s32.totalorder %s110, %s112
      %p116 = scmp.eq.s32.totalorder %s29, 0
      %p117 = por %p115, %p116
      %p118 = scmp.ne.s32.totalorder %s110, %s112
      %p119 = scmp.eq.s32.totalorder %s34, 1
      %p120 = por %p118, %p119
      %p121 = scmp.ne.s32.totalorder %s112, %s113
      %p122 = scmp.eq.s32.totalorder %s34, 0
      %p123 = por %p121, %p122
      %p124 = scmp.ne.s32.totalorder %s112, %s113
      %p125 = scmp.eq.s32.totalorder %s35, 1
      %p126 = por %p124, %p125
      %p128 = scmp.ne.s32.totalorder %s113, %s127
      %p129 = scmp.eq.s32.totalorder %s35, 0
      %p130 = por %p128, %p129
      %s132 = sadd.s32 %s131, 1
      %p135 = scmp.eq.s32.totalorder %s29, 1
      %p136 = scmp.ne.s32.totalorder %s131, %s133
      %p137 = scmp.eq.s32.totalorder %s29, 0
      %p138 = por %p136, %p137
      %p139 = scmp.ne.s32.totalorder %s131, %s133
      %p140 = scmp.eq.s32.totalorder %s34, 1
      %p141 = por %p139, %p140
      %p142 = scmp.ne.s32.totalorder %s133, %s134
      %p143 = scmp.eq.s32.totalorder %s34, 0
      %p144 = por %p142, %p143
      %p145 = scmp.ne.s32.totalorder %s133, %s134
      %p146 = scmp.eq.s32.totalorder %s35, 1
      %p147 = por %p145, %p146
      %p149 = scmp.ne.s32.totalorder %s134, %s148
      %p150 = scmp.eq.s32.totalorder %s35, 0
      %p151 = por %p149, %p150
      %s153 = sadd.s32 %s152, 1
      %p156 = scmp.eq.s32.totalorder %s29, 1
      %p157 = scmp.ne.s32.totalorder %s152, %s154
      %p158 = scmp.eq.s32.totalorder %s29, 0
      %p159 = por %p157, %p158
      %p160 = scmp.ne.s32.totalorder %s152, %s154
      %p161 = scmp.eq.s32.totalorder %s34, 1
      %p162 = por %p160, %p161
      %p163 = scmp.ne.s32.totalorder %s154, %s155
      %p164 = scmp.eq.s32.totalorder %s34, 0
      %p165 = por %p163, %p164
      %p166 = scmp.ne.s32.totalorder %s154, %s155
      %p167 = scmp.eq.s32.totalorder %s35, 1
      %p168 = por %p166, %p167
      %p170 = scmp.ne.s32.totalorder %s155, %s169
      %p171 = scmp.eq.s32.totalorder %s35, 0
      %p172 = por %p170, %p171
      %s174 = sadd.s32 %s173, 1
      %p177 = scmp.eq.s32.totalorder %s29, 1
      %p178 = scmp.ne.s32.totalorder %s173, %s175
      %p179 = scmp.eq.s32.totalorder %s29, 0
      %p180 = por %p178, %p179
      %p181 = scmp.ne.s32.totalorder %s173, %s175
      %p182 = scmp.eq.s32.totalorder %s34, 1
      %p183 = por %p181, %p182
      %p184 = scmp.ne.s32.totalorder %s175, %s176
      %p185 = scmp.eq.s32.totalorder %s34, 0
      %p186 = por %p184, %p185
      %p187 = scmp.ne.s32.totalorder %s175, %s176
      %p188 = scmp.eq.s32.totalorder %s35, 1
      %p189 = por %p187, %p188
      %p191 = scmp.ne.s32.totalorder %s176, %s190
      %p192 = scmp.eq.s32.totalorder %s35, 0
      %p193 = por %p191, %p192
      %s195 = sadd.s32 %s194, 1
      %p198 = scmp.eq.s32.totalorder %s29, 1
      %p199 = scmp.ne.s32.totalorder %s194, %s196
      %p200 = scmp.eq.s32.totalorder %s29, 0
      %p201 = por %p199, %p200
      %p202 = scmp.ne.s32.totalorder %s194, %s196
      %p203 = scmp.eq.s32.totalorder %s34, 1
      %p204 = por %p202, %p203
      %p205 = scmp.ne.s32.totalorder %s196, %s197
      %p206 = scmp.eq.s32.totalorder %s34, 0
      %p207 = por %p205, %p206
      %p208 = scmp.ne.s32.totalorder %s196, %s197
      %p209 = scmp.eq.s32.totalorder %s35, 1
      %p210 = por %p208, %p209
      %p212 = scmp.ne.s32.totalorder %s197, %s211
      %p213 = scmp.eq.s32.totalorder %s35, 0
      %p214 = por %p212, %p213
      %s216 = sadd.s32 %s215, 1
      %p219 = scmp.eq.s32.totalorder %s29, 1
      %p220 = scmp.ne.s32.totalorder %s215, %s217
      %p221 = scmp.eq.s32.totalorder %s29, 0
      %p222 = por %p220, %p221
      %p223 = scmp.ne.s32.totalorder %s215, %s217
      %p224 = scmp.eq.s32.totalorder %s34, 1
      %p225 = por %p223, %p224
      %p226 = scmp.ne.s32.totalorder %s217, %s218
      %p227 = scmp.eq.s32.totalorder %s34, 0
      %p228 = por %p226, %p227
      %p229 = scmp.ne.s32.totalorder %s217, %s218
      %p230 = scmp.eq.s32.totalorder %s35, 1
      %p231 = por %p229, %p230
      %p233 = scmp.ne.s32.totalorder %s218, %s232
      %p234 = scmp.eq.s32.totalorder %s35, 0
      %p235 = por %p233, %p234
      %s237 = sadd.s32 %s236, 1
      %p240 = scmp.eq.s32.totalorder %s29, 1
      %p241 = scmp.ne.s32.totalorder %s236, %s238
      %p242 = scmp.eq.s32.totalorder %s29, 0
      %p243 = por %p241, %p242
      %p244 = scmp.ne.s32.totalorder %s236, %s238
      %p245 = scmp.eq.s32.totalorder %s34, 1
      %p246 = por %p244, %p245
      %p247 = scmp.ne.s32.totalorder %s238, %s239
      %p248 = scmp.eq.s32.totalorder %s34, 0
      %p249 = por %p247, %p248
      %p250 = scmp.ne.s32.totalorder %s238, %s239
      %p251 = scmp.eq.s32.totalorder %s35, 1
      %p252 = por %p250, %p251
      %p254 = scmp.ne.s32.totalorder %s239, %s253
      %p255 = scmp.eq.s32.totalorder %s35, 0
      %p256 = por %p254, %p255
      %s258 = sadd.s32 %s257, 1
      %p261 = scmp.eq.s32.totalorder %s29, 1
      %p262 = scmp.ne.s32.totalorder %s257, %s259
      %p263 = scmp.eq.s32.totalorder %s29, 0
      %p264 = por %p262, %p263
      %p265 = scmp.ne.s32.totalorder %s257, %s259
      %p266 = scmp.eq.s32.totalorder %s34, 1
      %p267 = por %p265, %p266
      %p268 = scmp.ne.s32.totalorder %s259, %s260
      %p269 = scmp.eq.s32.totalorder %s34, 0
      %p270 = por %p268, %p269
      %p271 = scmp.ne.s32.totalorder %s259, %s260
      %p272 = scmp.eq.s32.totalorder %s35, 1
      %p273 = por %p271, %p272
      %p275 = scmp.ne.s32.totalorder %s260, %s274
      %p276 = scmp.eq.s32.totalorder %s35, 0
      %p277 = por %p275, %p276
      %s279 = sadd.s32 %s278, 1
      %p282 = scmp.eq.s32.totalorder %s29, 1
      %p283 = scmp.ne.s32.totalorder %s278, %s280
      %p284 = scmp.eq.s32.totalorder %s29, 0
      %p285 = por %p283, %p284
      %p286 = scmp.ne.s32.totalorder %s278, %s280
      %p287 = scmp.eq.s32.totalorder %s34, 1
      %p288 = por %p286, %p287
      %p289 = scmp.ne.s32.totalorder %s280, %s281
      %p290 = scmp.eq.s32.totalorder %s34, 0
      %p291 = por %p289, %p290
      %p292 = scmp.ne.s32.totalorder %s280, %s281
      %p293 = scmp.eq.s32.totalorder %s35, 1
      %p294 = por %p292, %p293
      %p296 = scmp.ne.s32.totalorder %s281, %s295
      %p297 = scmp.eq.s32.totalorder %s35, 0
      %p298 = por %p296, %p297
      %s300 = sadd.s32 %s299, 1
      %p303 = scmp.eq.s32.totalorder %s29, 1
      %p304 = scmp.ne.s32.totalorder %s299, %s301
      %p305 = scmp.eq.s32.totalorder %s29, 0
      %p306 = por %p304, %p305
      %p307 = scmp.ne.s32.totalorder %s299, %s301
      %p308 = scmp.eq.s32.totalorder %s34, 1
      %p309 = por %p307, %p308
      %p310 = scmp.ne.s32.totalorder %s301, %s302
      %p311 = scmp.eq.s32.totalorder %s34, 0
      %p312 = por %p310, %p311
      %p313 = scmp.ne.s32.totalorder %s301, %s302
      %p314 = scmp.eq.s32.totalorder %s35, 1
      %p315 = por %p313, %p314
      %p317 = scmp.ne.s32.totalorder %s302, %s316
      %p318 = scmp.eq.s32.totalorder %s35, 0
      %p319 = por %p317, %p318
      %s321 = sadd.s32 %s320, 1
      %p324 = scmp.eq.s32.totalorder %s29, 1
      %p325 = scmp.ne.s32.totalorder %s320, %s322
      %p326 = scmp.eq.s32.totalorder %s29, 0
      %p327 = por %p325, %p326
      %p328 = scmp.ne.s32.totalorder %s320, %s322
      %p329 = scmp.eq.s32.totalorder %s34, 1
      %p330 = por %p328, %p329
      %p331 = scmp.ne.s32.totalorder %s322, %s323
      %p332 = scmp.eq.s32.totalorder %s34, 0
      %p333 = por %p331, %p332
      %p334 = scmp.ne.s32.totalorder %s322, %s323
      %p335 = scmp.eq.s32.totalorder %s35, 1
      %p336 = por %p334, %p335
      %p338 = scmp.ne.s32.totalorder %s323, %s337
      %p339 = scmp.eq.s32.totalorder %s35, 0
      %p340 = por %p338, %p339
      %s342 = sadd.s32 %s341, 1
      %p345 = scmp.eq.s32.totalorder %s29, 1
      %p346 = scmp.ne.s32.totalorder %s341, %s343
      %p347 = scmp.eq.s32.totalorder %s29, 0
      %p348 = por %p346, %p347
      %p349 = scmp.ne.s32.totalorder %s341, %s343
      %p350 = scmp.eq.s32.totalorder %s34, 1
      %p351 = por %p349, %p350
      %p352 = scmp.ne.s32.totalorder %s343, %s344
      %p353 = scmp.eq.s32.totalorder %s34, 0
      %p354 = por %p352, %p353
      %p355 = scmp.ne.s32.totalorder %s343, %s344
      %p356 = scmp.eq.s32.totalorder %s35, 1
      %p357 = por %p355, %p356
      %p359 = scmp.ne.s32.totalorder %s344, %s358
      %p360 = scmp.eq.s32.totalorder %s35, 0
      %p361 = por %p359, %p360
      %s363 = sadd.s32 %s362, 1
      %p366 = scmp.eq.s32.totalorder %s29, 1
      %p367 = scmp.ne.s32.totalorder %s362, %s364
      %p368 = scmp.eq.s32.totalorder %s29, 0
      %p369 = por %p367, %p368
      %p370 = scmp.ne.s32.totalorder %s362, %s364
      %p371 = scmp.eq.s32.totalorder %s34, 1
      %p372 = por %p370, %p371
      %p373 = scmp.ne.s32.totalorder %s364, %s365
      %p374 = scmp.eq.s32.totalorder %s34, 0
      %p375 = por %p373, %p374
      %p376 = scmp.ne.s32.totalorder %s364, %s365
      %p377 = scmp.eq.s32.totalorder %s35, 1
      %p378 = por %p376, %p377
      %p380 = scmp.ne.s32.totalorder %s365, %s379
      %p381 = scmp.eq.s32.totalorder %s35, 0
      %p382 = por %p380, %p381
      %s384 = sadd.s32 %s383, 1
      %p387 = scmp.eq.s32.totalorder %s29, 1
      %p388 = scmp.ne.s32.totalorder %s383, %s385
      %p389 = scmp.eq.s32.totalorder %s29, 0
      %p390 = por %p388, %p389
      %p391 = scmp.ne.s32.totalorder %s383, %s385
      %p392 = scmp.eq.s32.totalorder %s34, 1
      %p393 = por %p391, %p392
      %p394 = scmp.ne.s32.totalorder %s385, %s386
      %p395 = scmp.eq.s32.totalorder %s34, 0
      %p396 = por %p394, %p395
      %p397 = scmp.ne.s32.totalorder %s385, %s386
      %p398 = scmp.eq.s32.totalorder %s35, 1
      %p399 = por %p397, %p398
      %p401 = scmp.ne.s32.totalorder %s386, %s400
      %p402 = scmp.eq.s32.totalorder %s35, 0
      %p403 = por %p401, %p402
      %s405 = sadd.s32 %s404, 1
      %p408 = scmp.eq.s32.totalorder %s29, 1
      %p409 = scmp.ne.s32.totalorder %s404, %s406
      %p410 = scmp.eq.s32.totalorder %s29, 0
      %p411 = por %p409, %p410
      %p412 = scmp.ne.s32.totalorder %s404, %s406
      %p413 = scmp.eq.s32.totalorder %s34, 1
      %p414 = por %p412, %p413
      %p415 = scmp.ne.s32.totalorder %s406, %s407
      %p416 = scmp.eq.s32.totalorder %s34, 0
      %p417 = por %p415, %p416
      %p418 = scmp.ne.s32.totalorder %s406, %s407
      %p419 = scmp.eq.s32.totalorder %s35, 1
      %p420 = por %p418, %p419
      %p422 = scmp.ne.s32.totalorder %s407, %s421
      %p423 = scmp.eq.s32.totalorder %s35, 0
      %p424 = por %p422, %p423
      %s426 = sadd.s32 %s425, 1
      %p429 = scmp.eq.s32.totalorder %s29, 1
      %p430 = scmp.ne.s32.totalorder %s425, %s427
      %p431 = scmp.eq.s32.totalorder %s29, 0
      %p432 = por %p430, %p431
      %p433 = scmp.ne.s32.totalorder %s425, %s427
      %p434 = scmp.eq.s32.totalorder %s34, 1
      %p435 = por %p433, %p434
      %p436 = scmp.ne.s32.totalorder %s427, %s428
      %p437 = scmp.eq.s32.totalorder %s34, 0
      %p438 = por %p436, %p437
      %p439 = scmp.ne.s32.totalorder %s427, %s428
      %p440 = scmp.eq.s32.totalorder %s35, 1
      %p441 = por %p439, %p440
      %p443 = scmp.ne.s32.totalorder %s428, %s442
      %p444 = scmp.eq.s32.totalorder %s35, 0
      %p445 = por %p443, %p444
      %s447 = sadd.s32 %s446, 1
      %p450 = scmp.eq.s32.totalorder %s29, 1
      %p451 = scmp.ne.s32.totalorder %s446, %s448
      %p452 = scmp.eq.s32.totalorder %s29, 0
      %p453 = por %p451, %p452
      %p454 = scmp.ne.s32.totalorder %s446, %s448
      %p455 = scmp.eq.s32.totalorder %s34, 1
      %p456 = por %p454, %p455
      %p457 = scmp.ne.s32.totalorder %s448, %s449
      %p458 = scmp.eq.s32.totalorder %s34, 0
      %p459 = por %p457, %p458
      %p460 = scmp.ne.s32.totalorder %s448, %s449
      %p461 = scmp.eq.s32.totalorder %s35, 1
      %p462 = por %p460, %p461
      %p464 = scmp.ne.s32.totalorder %s449, %s463
      %p465 = scmp.eq.s32.totalorder %s35, 0
      %p466 = por %p464, %p465
      %s467 = ssub.s32 %s29, %s36
      %p468 = scmp.eq.s32.totalorder %s467, 0
      %s470 = sadd.s32 %s469, 1
      %s471 = scalar_select %p468, %s469, %s470
      %p474 = pneg %p468
      %p475 = scmp.eq.s32.totalorder %s29, 1
      %p476 = por %p474, %p475
      %p477 = scmp.ne.s32.totalorder %s469, %s472
      %p478 = scmp.eq.s32.totalorder %s29, 0
      %p479 = por %p477, %p478
      %p480 = scmp.ne.s32.totalorder %s469, %s472
      %p481 = scmp.eq.s32.totalorder %s34, 1
      %p482 = por %p480, %p481
      %p483 = scmp.ne.s32.totalorder %s472, %s473
      %p484 = scmp.eq.s32.totalorder %s34, 0
      %p485 = por %p483, %p484
      %p486 = scmp.ne.s32.totalorder %s472, %s473
      %p487 = scmp.eq.s32.totalorder %s35, 1
      %p488 = por %p486, %p487
      %p490 = scmp.ne.s32.totalorder %s473, %s489
      %p491 = scmp.eq.s32.totalorder %s35, 0
      %p492 = por %p490, %p491
      %p493 = scmp.le.s32.totalorder 1, %s29
      %p494 = scmp.lt.s32.totalorder %s29, 3
      %p495 = pnand %p493, %p494
      %p496 = pneg %p495
      // Predicated region
      $region9: #{bert_classifier_forward.1} parent=5 // pred_check
        _
      $region10: #{bert_classifier_forward.1} parent=5 // pred_check_branch
        %498 = sbr.rel (%p495) target = $region12
      $region11: #{bert_classifier_forward.1} parent=5 // pred_region
        %s499 = ssub.s32 %s29, 1
        // Predicated region
        $region13: #{bert_classifier_forward.1} parent=11 // pred_check
          %p500 = pneg %p102
        $region14: #{bert_classifier_forward.1} parent=11 // pred_check_branch
          %502 = sbr.rel (%p500) target = $region16
        $region15: #{bert_classifier_forward.1} parent=11 // pred_region
          _
        $region16: #{bert_classifier_forward.1} parent=11 // pred_fallthru
          _
        // Predicated region
        $region17: #{bert_classifier_forward.1} parent=11 // pred_check
          %p503 = pneg %p123
        $region18: #{bert_classifier_forward.1} parent=11 // pred_check_branch
          %505 = sbr.rel (%p503) target = $region20
        $region19: #{bert_classifier_forward.1} parent=11 // pred_region
          _
        $region20: #{bert_classifier_forward.1} parent=11 // pred_fallthru
          _
        // Predicated region
        $region21: #{bert_classifier_forward.1} parent=11 // pred_check
          %p506 = pneg %p144
        $region22: #{bert_classifier_forward.1} parent=11 // pred_check_branch
          %508 = sbr.rel (%p506) target = $region24
        $region23: #{bert_classifier_forward.1} parent=11 // pred_region
          _
        $region24: #{bert_classifier_forward.1} parent=11 // pred_fallthru
          _
        // Predicated region
        $region25: #{bert_classifier_forward.1} parent=11 // pred_check
          %p509 = pneg %p165
        $region26: #{bert_classifier_forward.1} parent=11 // pred_check_branch
          %511 = sbr.rel (%p509) target = $region28
        $region27: #{bert_classifier_forward.1} parent=11 // pred_region
          _
        $region28: #{bert_classifier_forward.1} parent=11 // pred_fallthru
          _
        // Predicated region
        $region29: #{bert_classifier_forward.1} parent=11 // pred_check
          %p512 = pneg %p186
        $region30: #{bert_classifier_forward.1} parent=11 // pred_check_branch
          %514 = sbr.rel (%p512) target = $region32
        $region31: #{bert_classifier_forward.1} parent=11 // pred_region
          _
        $region32: #{bert_classifier_forward.1} parent=11 // pred_fallthru
          _
        // Predicated region
        $region33: #{bert_classifier_forward.1} parent=11 // pred_check
          %p515 = pneg %p207
        $region34: #{bert_classifier_forward.1} parent=11 // pred_check_branch
          %517 = sbr.rel (%p515) target = $region36
        $region35: #{bert_classifier_forward.1} parent=11 // pred_region
          _
        $region36: #{bert_classifier_forward.1} parent=11 // pred_fallthru
          _
        // Predicated region
        $region37: #{bert_classifier_forward.1} parent=11 // pred_check
          %p518 = pneg %p228
        $region38: #{bert_classifier_forward.1} parent=11 // pred_check_branch
          %520 = sbr.rel (%p518) target = $region40
        $region39: #{bert_classifier_forward.1} parent=11 // pred_region
          _
        $region40: #{bert_classifier_forward.1} parent=11 // pred_fallthru
          _
        // Predicated region
        $region41: #{bert_classifier_forward.1} parent=11 // pred_check
          %p521 = pneg %p249
        $region42: #{bert_classifier_forward.1} parent=11 // pred_check_branch
          %523 = sbr.rel (%p521) target = $region44
        $region43: #{bert_classifier_forward.1} parent=11 // pred_region
          _
        $region44: #{bert_classifier_forward.1} parent=11 // pred_fallthru
          _
        // Predicated region
        $region45: #{bert_classifier_forward.1} parent=11 // pred_check
          %p524 = pneg %p270
        $region46: #{bert_classifier_forward.1} parent=11 // pred_check_branch
          %526 = sbr.rel (%p524) target = $region48
        $region47: #{bert_classifier_forward.1} parent=11 // pred_region
          _
        $region48: #{bert_classifier_forward.1} parent=11 // pred_fallthru
          _
        // Predicated region
        $region49: #{bert_classifier_forward.1} parent=11 // pred_check
          %p527 = pneg %p291
        $region50: #{bert_classifier_forward.1} parent=11 // pred_check_branch
          %529 = sbr.rel (%p527) target = $region52
        $region51: #{bert_classifier_forward.1} parent=11 // pred_region
          _
        $region52: #{bert_classifier_forward.1} parent=11 // pred_fallthru
          _
        // Predicated region
        $region53: #{bert_classifier_forward.1} parent=11 // pred_check
          %p530 = pneg %p312
        $region54: #{bert_classifier_forward.1} parent=11 // pred_check_branch
          %532 = sbr.rel (%p530) target = $region56
        $region55: #{bert_classifier_forward.1} parent=11 // pred_region
          _
        $region56: #{bert_classifier_forward.1} parent=11 // pred_fallthru
          _
        // Predicated region
        $region57: #{bert_classifier_forward.1} parent=11 // pred_check
          %p533 = pneg %p333
        $region58: #{bert_classifier_forward.1} parent=11 // pred_check_branch
          %535 = sbr.rel (%p533) target = $region60
        $region59: #{bert_classifier_forward.1} parent=11 // pred_region
          _
        $region60: #{bert_classifier_forward.1} parent=11 // pred_fallthru
          _
        // Predicated region
        $region61: #{bert_classifier_forward.1} parent=11 // pred_check
          %p536 = pneg %p354
        $region62: #{bert_classifier_forward.1} parent=11 // pred_check_branch
          %538 = sbr.rel (%p536) target = $region64
        $region63: #{bert_classifier_forward.1} parent=11 // pred_region
          _
        $region64: #{bert_classifier_forward.1} parent=11 // pred_fallthru
          _
        // Predicated region
        $region65: #{bert_classifier_forward.1} parent=11 // pred_check
          %p539 = pneg %p375
        $region66: #{bert_classifier_forward.1} parent=11 // pred_check_branch
          %541 = sbr.rel (%p539) target = $region68
        $region67: #{bert_classifier_forward.1} parent=11 // pred_region
          _
        $region68: #{bert_classifier_forward.1} parent=11 // pred_fallthru
          _
        // Predicated region
        $region69: #{bert_classifier_forward.1} parent=11 // pred_check
          %p542 = pneg %p396
        $region70: #{bert_classifier_forward.1} parent=11 // pred_check_branch
          %544 = sbr.rel (%p542) target = $region72
        $region71: #{bert_classifier_forward.1} parent=11 // pred_region
          _
        $region72: #{bert_classifier_forward.1} parent=11 // pred_fallthru
          _
        // Predicated region
        $region73: #{bert_classifier_forward.1} parent=11 // pred_check
          %p545 = pneg %p417
        $region74: #{bert_classifier_forward.1} parent=11 // pred_check_branch
          %547 = sbr.rel (%p545) target = $region76
        $region75: #{bert_classifier_forward.1} parent=11 // pred_region
          _
        $region76: #{bert_classifier_forward.1} parent=11 // pred_fallthru
          _
        // Predicated region
        $region77: #{bert_classifier_forward.1} parent=11 // pred_check
          %p548 = pneg %p438
        $region78: #{bert_classifier_forward.1} parent=11 // pred_check_branch
          %550 = sbr.rel (%p548) target = $region80
        $region79: #{bert_classifier_forward.1} parent=11 // pred_region
          _
        $region80: #{bert_classifier_forward.1} parent=11 // pred_fallthru
          _
        // Predicated region
        $region81: #{bert_classifier_forward.1} parent=11 // pred_check
          %p551 = pneg %p459
        $region82: #{bert_classifier_forward.1} parent=11 // pred_check_branch
          %553 = sbr.rel (%p551) target = $region84
        $region83: #{bert_classifier_forward.1} parent=11 // pred_region
          _
        $region84: #{bert_classifier_forward.1} parent=11 // pred_fallthru
          _
      $region12: #{bert_classifier_forward.1} parent=5 // pred_fallthru
        _
      %p554 = scmp.lt.s32.totalorder %s29, 2
      // Predicated region
      $region85: #{bert_classifier_forward.1} parent=5 // pred_check
        %p555 = pneg %p554
      $region86: #{bert_classifier_forward.1} parent=5 // pred_check_branch
        %557 = sbr.rel (%p555) target = $region88
      $region87: #{bert_classifier_forward.1} parent=5 // pred_region
        // Predicated region
        $region89: #{bert_classifier_forward.1} parent=87 // pred_check
          %p558 = pneg %p49
        $region90: #{bert_classifier_forward.1} parent=87 // pred_check_branch
          %560 = sbr.rel (%p558) target = $region92
        $region91: #{bert_classifier_forward.1} parent=87 // pred_region
          %p561 = scmp.lt.s32.totalorder %s29, 1
          %s562 = scalar_select %p561, %s29, 1
          %s563 = smul.addr %s562, 8
          %s564 = scalar_lea.vmem %s0, %s563
        $region92: #{bert_classifier_forward.1} parent=87 // pred_fallthru
          _
        // Predicated region
        $region93: #{bert_classifier_forward.1} parent=87 // pred_check
          %p565 = pneg %p75
        $region94: #{bert_classifier_forward.1} parent=87 // pred_check_branch
          %567 = sbr.rel (%p565) target = $region96
        $region95: #{bert_classifier_forward.1} parent=87 // pred_region
          %p568 = scmp.lt.s32.totalorder %s29, 1
          %s569 = scalar_select %p568, %s29, 1
          %s570 = scalar_lea.vmem %s1, %s569
        $region96: #{bert_classifier_forward.1} parent=87 // pred_fallthru
          _
      $region88: #{bert_classifier_forward.1} parent=5 // pred_fallthru
        _
      %p571 = scmp.le.s32.totalorder 1, %s29
      %p572 = scmp.lt.s32.totalorder %s29, 3
      %p573 = pnand %p571, %p572
      %p574 = pneg %p573
      // Predicated region
      $region97: #{bert_classifier_forward.1} parent=5 // pred_check
        _
      $region98: #{bert_classifier_forward.1} parent=5 // pred_check_branch
        %576 = sbr.rel (%p573) target = $region100
      $region99: #{bert_classifier_forward.1} parent=5 // pred_region
        %s577 = ssub.s32 %s29, 1
        %p578 = scmp.lt.s32.totalorder %s34, 1
        %s579 = scalar_select %p578, %s34, 1
        %s580 = smul.addr %s579, 8
        %s581 = scalar_lea.vmem %s0, %s580
        %p582 = pneg %p55
        %p583 = pneg %p52
        %p584 = scmp.lt.s32.totalorder %s34, 1
        %s585 = scalar_select %p584, %s34, 1
        %s586 = scalar_lea.vmem %s1, %s585
        %p587 = pneg %p81
        %p588 = pneg %p78
        %p589 = pneg %p102
        %p590 = pneg %p99
        %p591 = pneg %p123
        %p592 = pneg %p120
        %p593 = pneg %p144
        %p594 = pneg %p141
        %p595 = pneg %p165
        %p596 = pneg %p162
        %p597 = pneg %p186
        %p598 = pneg %p183
        %p599 = pneg %p207
        %p600 = pneg %p204
        %p601 = pneg %p228
        %p602 = pneg %p225
        %p603 = pneg %p249
        %p604 = pneg %p246
        %p605 = pneg %p270
        %p606 = pneg %p267
        %p607 = pneg %p291
        %p608 = pneg %p288
        %p609 = pneg %p312
        %p610 = pneg %p309
        %p611 = pneg %p333
        %p612 = pneg %p330
        %p613 = pneg %p354
        %p614 = pneg %p351
        %p615 = pneg %p375
        %p616 = pneg %p372
        %p617 = pneg %p396
        %p618 = pneg %p393
        %p619 = pneg %p417
        %p620 = pneg %p414
        %p621 = pneg %p438
        %p622 = pneg %p435
        %p623 = pneg %p459
        %p624 = pneg %p456
        %p625 = pneg %p485
        %p626 = pneg %p482
        %s627 = sand.u32 %s472, 1
        %s628 = scalar_lea.sflag [#allocation3], %s627
        %s629 = sand.u32 %s472, 1
        %s630 = scalar_lea.vmem [#allocation2], %s629
        %p631 = scmp.lt.s32.totalorder %s34, 1
        %s632 = scalar_select %p631, %s34, 1
        %s633 = smul.addr %s632, 8
        %s634 = scalar_lea.vmem %s0, %s633
        %p635 = scmp.lt.s32.totalorder %s34, 1
        %s636 = scalar_select %p635, %s34, 1
        %s637 = scalar_lea.vmem %s1, %s636
        %v639 = vld [vmem:[%s634] sm:$0xff]
        %v640 = vld [vmem:[%s2] sm:$0x1]
        %v641 = vld [vmem:[%s3] sm:$0x1]
        %vm642 = vcmask 261120
        %v643 = vsel %vm642, %v639, 0.0
        %644 = vadd.xlane.f32.xlu0 %v643
        %v645 = vpop.xlane.xlu0 %644
        %v646 = vrcp.pop 32.0
        %v647 = vmul.f32 %v645, %v646
        %v648 = vsub.f32 %v639, %v647
        %v649 = vmul.f32 %v648, %v648
        %v650 = vsel %vm642, %v649, 0.0
        %651 = vadd.xlane.f32.xlu0 %v650
        %v652 = vpop.xlane.xlu0 %651
        %v653 = vmul.f32 %v652, %v646
        %v654 = vadd.f32 %v653, 1e-12
        %v655 = vrsqrt.pop %v654
        %v656 = vmul.f32 %v648, %v655
        %v658 = vlaneseq
        %v659 = vshrl.u32 %v658, 7
        %v660 = vsub.s32 0, %v659
        %v661 = vrot.slane %v640, %v660
        %v663 = vmul.f32 %v656, %v661
        %v665 = vlaneseq
        %v666 = vshrl.u32 %v665, 7
        %v667 = vsub.s32 0, %v666
        %v668 = vrot.slane %v641, %v667
        %v670 = vadd.f32 %v663, %v668
        %v671 = vld [vmem:[%s637] sm:$0x1]
        %v672 = vsub.f32 1.0, %v671
        %v673 = vmul.f32 %v672, -1e+09
        loop: start=0, step=1, limit=2
        $region101: #{bert_classifier_forward.1} parent=99 // loop_pre_header
          _
        $region102: #{bert_classifier_forward.1} parent=99 // loop_header
          %s675 = sphi 0, %s679
          %p676 = scmp.ge.s32.totalorder %s675, 2
          %v680 = vphi %v670, %v1326
        $region103: #{bert_classifier_forward.1} parent=99 // loop_header_branch
          %678 = sbr.rel (%p676) target = $region107
        $region104: #{bert_classifier_forward.1} parent=99 // loop_body
          %v681 = vpack.c.bf16 %v680, %v680
          %s682 = smul.u32 %s675, 4
          %s683 = smul.addr %s682, 4
          %s684 = scalar_lea.vmem %s4, %s683
          %v685 = vld [vmem:[%s684] sm:$0xf]
          %v686 = vld [vmem:[%s684 + $0x4] sm:$0xf]
          %v687 = vld [vmem:[%s684 + $0x8] sm:$0xf]
          %v688 = vld [vmem:[%s684 + $0xc] sm:$0xf]
          %s689 = scalar_lea.vmem %s5, %s675
          %v690 = vld [vmem:[%s689] sm:$0x1]
          %v692 = vlaneseq
          %v693 = vshrl.u32 %v692, 7
          %v694 = vsub.s32 0, %v693
          %v695 = vrot.slane %v690, %v694
          %v701 = vunpack.c.l.b16 %v685
          %v702 = vunpack.c.l.b16 %v686
          %v703 = vunpack.c.l.b16 %v687
          %v704 = vunpack.c.l.b16 %v688
          %v705 = vpack.c.b16 %v702, %v701
          %v706 = vpack.c.b16 %v704, %v703
          %v710 = vsel %vm642, %v681, 0
          %712 = vmatprep.subr.bf16.mxu0 0
          %713 = vmatpush1.bf16.msra.mxu0 %v705
          %714 = vmatprep.subr.bf16.mxu0 0
          %715 = vmatpush1.bf16.msra.mxu0 %v706
          %716 = vmatprep.subr.bf16.mxu0 0
          %717 = vmatpush1.bf16.msra.mxu0 0
          %718 = vmatprep.subr.bf16.mxu0 0
          %719 = vmatpush1.bf16.msra.mxu0 0
          %720 = vmatprep.subr.bf16.mxu0 0
          %721 = vmatpush1.bf16.msra.mxu0 0
          %722 = vmatprep.subr.bf16.mxu0 0
          %723 = vmatpush1.bf16.msra.mxu0 0
          %724 = vmatprep.subr.bf16.mxu0 0
          %725 = vmatpush1.bf16.msra.mxu0 0
          %726 = vmatprep.subr.bf16.mxu0 0
          %727 = vmatpush1.bf16.msra.mxu0 0
          %728 = vmatprep.subr.bf16.mxu0 0
          %729 = vmatpush1.bf16.msra.mxu0 0
          %730 = vmatprep.subr.bf16.mxu0 0
          %731 = vmatpush1.bf16.msra.mxu0 0
          %732 = vmatprep.subr.bf16.mxu0 0
          %733 = vmatpush1.bf16.msra.mxu0 0
          %734 = vmatprep.subr.bf16.mxu0 0
          %735 = vmatpush1.bf16.msra.mxu0 0
          %736 = vmatprep.subr.bf16.mxu0 0
          %737 = vmatpush1.bf16.msra.mxu0 0
          %738 = vmatprep.subr.bf16.mxu0 0
          %739 = vmatpush1.bf16.msra.mxu0 0
          %740 = vmatprep.subr.bf16.mxu0 0
          %741 = vmatpush1.bf16.msra.mxu0 0
          %742 = vmatprep.subr.bf16.mxu0 0
          %743 = vmatpush1.bf16.msra.mxu0 0
          %744 = vmatprep.mubr.bf16.mxu0 0
          %745 = vmatmul.mubr.bf16.gmra.mrb[0].mxu0 %v710
          %v746 = vpop.f32.mrb[0].mxu0
          %v747 = vadd.f32 %v695, %v746
          %v748 = vpop.f32.mrb[0].mxu0
          %v749 = vpop.f32.mrb[0].mxu0
          %v750 = vpop.f32.mrb[0].mxu0
          %751 = vdwg.mxu0
          %v752 = vpack.c.bf16 %v747, %v747
          %s753 = smul.addr %s682, 4
          %s754 = scalar_lea.vmem %s6, %s753
          %v755 = vld [vmem:[%s754] sm:$0xf]
          %v756 = vld [vmem:[%s754 + $0x4] sm:$0xf]
          %v757 = vld [vmem:[%s754 + $0x8] sm:$0xf]
          %v758 = vld [vmem:[%s754 + $0xc] sm:$0xf]
          %760 = vrot.lane.b32.xlu0 %v752, 96
          %v761 = vpop.permute.xlu0 %760
          %vm762 = vcmask 130048
          %v764 = vsel %vm762, %v752, 0
          %v767 = vsel %vm762, %v761, 0
          %769 = vmatprep.subr.bf16.mxu0 0
          %770 = vmatpush1.bf16.xpose.msra.mxu0 %v767
          %771 = vmatprep.subr.bf16.mxu0 0
          %772 = vmatpush1.bf16.xpose.msra.mxu0 0
          %773 = vmatprep.subr.bf16.mxu0 0
          %774 = vmatpush1.bf16.xpose.msra.mxu0 0
          %775 = vmatprep.subr.bf16.mxu0 0
          %776 = vmatpush1.bf16.xpose.msra.mxu0 0
          %777 = vmatprep.subr.bf16.mxu0 0
          %778 = vmatpush1.bf16.xpose.msra.mxu0 0
          %779 = vmatprep.subr.bf16.mxu0 0
          %780 = vmatpush1.bf16.xpose.msra.mxu0 0
          %781 = vmatprep.subr.bf16.mxu0 0
          %782 = vmatpush1.bf16.xpose.msra.mxu0 0
          %783 = vmatprep.subr.bf16.mxu0 0
          %784 = vmatpush1.bf16.xpose.msra.mxu0 0
          %785 = vmatprep.subr.bf16.mxu0 0
          %786 = vmatpush1.bf16.xpose.msra.mxu0 0
          %787 = vmatprep.subr.bf16.mxu0 0
          %788 = vmatpush1.bf16.xpose.msra.mxu0 0
          %789 = vmatprep.subr.bf16.mxu0 0
          %790 = vmatpush1.bf16.xpose.msra.mxu0 0
          %791 = vmatprep.subr.bf16.mxu0 0
          %792 = vmatpush1.bf16.xpose.msra.mxu0 0
          %793 = vmatprep.subr.bf16.mxu0 0
          %794 = vmatpush1.bf16.xpose.msra.mxu0 0
          %795 = vmatprep.subr.bf16.mxu0 0
          %796 = vmatpush1.bf16.xpose.msra.mxu0 0
          %797 = vmatprep.subr.bf16.mxu0 0
          %798 = vmatpush1.bf16.xpose.msra.mxu0 0
          %799 = vmatprep.subr.bf16.mxu0 0
          %800 = vmatpush1.bf16.xpose.msra.mxu0 0
          %801 = vmatprep.mubr.bf16.mxu0 0
          %802 = vmatmul.mubr.bf16.gmra.mrb[0].mxu0 %v764
          %v803 = vpop.f32.mrb[0].mxu0
          %v804 = vadd.f32 0.0, %v803
          %v805 = vpop.f32.mrb[0].mxu0
          %v806 = vpop.f32.mrb[0].mxu0
          %v807 = vpop.f32.mrb[0].mxu0
          %808 = vdwg.mxu0
          %v809 = vmul.f32 %v804, 0.25
          %v811 = vlaneseq
          %v812 = vshrl.u32 %v811, 7
          %v813 = vsub.s32 0, %v812
          %v814 = vrot.slane %v673, %v813
          %v816 = vadd.f32 %v809, %v814
          %vm817 = vcmask 64512
          %v818 = vsel %vm817, %v816, -inf
          %819 = vmax.xlane.f32.xlu0 %v818
          %v820 = vpop.xlane.xlu0 %819
          %v821 = vsub.f32 %v816, %v820
          %v822 = vmul.f32 %v821, 1.442695
          %v823 = vpow.pop %v822
          %v824 = vsel %vm817, %v823, 0.0
          %825 = vadd.xlane.f32.xlu0 %v824
          %v826 = vpop.xlane.xlu0 %825
          %v827 = vrcp.pop %v826
          %v828 = vmul.f32 %v823, %v827
          %v829 = vpack.c.bf16 %v828, %v828
          %830 = vrot.lane.b32.xlu0 %v752, 64
          %v831 = vpop.permute.xlu0 %830
          %v833 = vsel %vm817, %v829, 0
          %vm835 = vcmask 1043456
          %v837 = vsel %vm835, %v831, 0
          %839 = vmatprep.subr.bf16.mxu0 0
          %840 = vmatpush1.bf16.msra.mxu0 %v837
          %841 = vmatprep.subr.bf16.mxu0 0
          %842 = vmatpush1.bf16.msra.mxu0 0
          %843 = vmatprep.subr.bf16.mxu0 0
          %844 = vmatpush1.bf16.msra.mxu0 0
          %845 = vmatprep.subr.bf16.mxu0 0
          %846 = vmatpush1.bf16.msra.mxu0 0
          %847 = vmatprep.subr.bf16.mxu0 0
          %848 = vmatpush1.bf16.msra.mxu0 0
          %849 = vmatprep.subr.bf16.mxu0 0
          %850 = vmatpush1.bf16.msra.mxu0 0
          %851 = vmatprep.subr.bf16.mxu0 0
          %852 = vmatpush1.bf16.msra.mxu0 0
          %853 = vmatprep.subr.bf16.mxu0 0
          %854 = vmatpush1.bf16.msra.mxu0 0
          %855 = vmatprep.subr.bf16.mxu0 0
          %856 = vmatpush1.bf16.msra.mxu0 0
          %857 = vmatprep.subr.bf16.mxu0 0
          %858 = vmatpush1.bf16.msra.mxu0 0
          %859 = vmatprep.subr.bf16.mxu0 0
          %860 = vmatpush1.bf16.msra.mxu0 0
          %861 = vmatprep.subr.bf16.mxu0 0
          %862 = vmatpush1.bf16.msra.mxu0 0
          %863 = vmatprep.subr.bf16.mxu0 0
          %864 = vmatpush1.bf16.msra.mxu0 0
          %865 = vmatprep.subr.bf16.mxu0 0
          %866 = vmatpush1.bf16.msra.mxu0 0
          %867 = vmatprep.subr.bf16.mxu0 0
          %868 = vmatpush1.bf16.msra.mxu0 0
          %869 = vmatprep.subr.bf16.mxu0 0
          %870 = vmatpush1.bf16.msra.mxu0 0
          %871 = vmatprep.mubr.bf16.mxu0 0
          %872 = vmatmul.mubr.bf16.gmra.mrb[0].mxu0 %v833
          %v873 = vpop.f32.mrb[0].mxu0
          %v874 = vadd.f32 0.0, %v873
          %v875 = vpop.f32.mrb[0].mxu0
          %v876 = vpop.f32.mrb[0].mxu0
          %v877 = vpop.f32.mrb[0].mxu0
          %878 = vdwg.mxu0
          %v879 = vpack.c.bf16 %v874, %v874
          %880 = vrot.lane.b32.xlu0 %v752, 112
          %v881 = vpop.permute.xlu0 %880
          %882 = vrot.lane.b32.xlu0 %v752, 80
          %v883 = vpop.permute.xlu0 %882
          %v885 = vsel %vm762, %v881, 0
          %v888 = vsel %vm762, %v883, 0
          %890 = vmatprep.subr.bf16.mxu0 0
          %891 = vmatpush1.bf16.xpose.msra.mxu0 %v888
          %892 = vmatprep.subr.bf16.mxu0 0
          %893 = vmatpush1.bf16.xpose.msra.mxu0 0
          %894 = vmatprep.subr.bf16.mxu0 0
          %895 = vmatpush1.bf16.xpose.msra.mxu0 0
          %896 = vmatprep.subr.bf16.mxu0 0
          %897 = vmatpush1.bf16.xpose.msra.mxu0 0
          %898 = vmatprep.subr.bf16.mxu0 0
          %899 = vmatpush1.bf16.xpose.msra.mxu0 0
          %900 = vmatprep.subr.bf16.mxu0 0
          %901 = vmatpush1.bf16.xpose.msra.mxu0 0
          %902 = vmatprep.subr.bf16.mxu0 0
          %903 = vmatpush1.bf16.xpose.msra.mxu0 0
          %904 = vmatprep.subr.bf16.mxu0 0
          %905 = vmatpush1.bf16.xpose.msra.mxu0 0
          %906 = vmatprep.subr.bf16.mxu0 0
          %907 = vmatpush1.bf16.xpose.msra.mxu0 0
          %908 = vmatprep.subr.bf16.mxu0 0
          %909 = vmatpush1.bf16.xpose.msra.mxu0 0
          %910 = vmatprep.subr.bf16.mxu0 0
          %911 = vmatpush1.bf16.xpose.msra.mxu0 0
          %912 = vmatprep.subr.bf16.mxu0 0
          %913 = vmatpush1.bf16.xpose.msra.mxu0 0
          %914 = vmatprep.subr.bf16.mxu0 0
          %915 = vmatpush1.bf16.xpose.msra.mxu0 0
          %916 = vmatprep.subr.bf16.mxu0 0
          %917 = vmatpush1.bf16.xpose.msra.mxu0 0
          %918 = vmatprep.subr.bf16.mxu0 0
          %919 = vmatpush1.bf16.xpose.msra.mxu0 0
          %920 = vmatprep.subr.bf16.mxu0 0
          %921 = vmatpush1.bf16.xpose.msra.mxu0 0
          %922 = vmatprep.mubr.bf16.mxu0 0
          %923 = vmatmul.mubr.bf16.gmra.mrb[0].mxu0 %v885
          %v924 = vpop.f32.mrb[0].mxu0
          %v925 = vadd.f32 0.0, %v924
          %v926 = vpop.f32.mrb[0].mxu0
          %v927 = vpop.f32.mrb[0].mxu0
          %v928 = vpop.f32.mrb[0].mxu0
          %929 = vdwg.mxu0
          %v930 = vmul.f32 %v925, 0.25
          %v931 = vadd.f32 %v930, %v814
          %v932 = vsel %vm817, %v931, -inf
          %933 = vmax.xlane.f32.xlu0 %v932
          %v934 = vpop.xlane.xlu0 %933
          %v935 = vsub.f32 %v931, %v934
          %v936 = vmul.f32 %v935, 1.442695
          %v937 = vpow.pop %v936
          %v938 = vsel %vm817, %v937, 0.0
          %939 = vadd.xlane.f32.xlu0 %v938
          %v940 = vpop.xlane.xlu0 %939
          %v941 = vrcp.pop %v940
          %v942 = vmul.f32 %v937, %v941
          %v943 = vpack.c.bf16 %v942, %v942
          %944 = vrot.lane.b32.xlu0 %v752, 48
          %v945 = vpop.permute.xlu0 %944
          %v947 = vsel %vm817, %v943, 0
          %v950 = vsel %vm835, %v945, 0
          %952 = vmatprep.subr.bf16.mxu0 0
          %953 = vmatpush1.bf16.msra.mxu0 %v950
          %954 = vmatprep.subr.bf16.mxu0 0
          %955 = vmatpush1.bf16.msra.mxu0 0
          %956 = vmatprep.subr.bf16.mxu0 0
          %957 = vmatpush1.bf16.msra.mxu0 0
          %958 = vmatprep.subr.bf16.mxu0 0
          %959 = vmatpush1.bf16.msra.mxu0 0
          %960 = vmatprep.subr.bf16.mxu0 0
          %961 = vmatpush1.bf16.msra.mxu0 0
          %962 = vmatprep.subr.bf16.mxu0 0
          %963 = vmatpush1.bf16.msra.mxu0 0
          %964 = vmatprep.subr.bf16.mxu0 0
          %965 = vmatpush1.bf16.msra.mxu0 0
          %966 = vmatprep.subr.bf16.mxu0 0
          %967 = vmatpush1.bf16.msra.mxu0 0
          %968 = vmatprep.subr.bf16.mxu0 0
          %969 = vmatpush1.bf16.msra.mxu0 0
          %970 = vmatprep.subr.bf16.mxu0 0
          %971 = vmatpush1.bf16.msra.mxu0 0
          %972 = vmatprep.subr.bf16.mxu0 0
          %973 = vmatpush1.bf16.msra.mxu0 0
          %974 = vmatprep.subr.bf16.mxu0 0
          %975 = vmatpush1.bf16.msra.mxu0 0
          %976 = vmatprep.subr.bf16.mxu0 0
          %977 = vmatpush1.bf16.msra.mxu0 0
          %978 = vmatprep.subr.bf16.mxu0 0
          %979 = vmatpush1.bf16.msra.mxu0 0
          %980 = vmatprep.subr.bf16.mxu0 0
          %981 = vmatpush1.bf16.msra.mxu0 0
          %982 = vmatprep.subr.bf16.mxu0 0
          %983 = vmatpush1.bf16.msra.mxu0 0
          %984 = vmatprep.mubr.bf16.mxu0 0
          %985 = vmatmul.mubr.bf16.gmra.mrb[0].mxu0 %v947
          %v986 = vpop.f32.mrb[0].mxu0
          %v987 = vadd.f32 0.0, %v986
          %v988 = vpop.f32.mrb[0].mxu0
          %v989 = vpop.f32.mrb[0].mxu0
          %v990 = vpop.f32.mrb[0].mxu0
          %991 = vdwg.mxu0
          %v992 = vpack.c.bf16 %v987, %v987
          %v995 = vunpack.c.l.b16 %v757
          %v996 = vunpack.c.l.b16 %v758
          %v997 = vpack.c.b16 %v996, %v995
          %v1000 = vsel %vm762, %v992, 0
          %1002 = vmatprep.subr.bf16.mxu0 0
          %1003 = vmatpush1.bf16.msra.mxu0 %v997
          %1004 = vmatprep.subr.bf16.mxu0 0
          %1005 = vmatpush1.bf16.msra.mxu0 0
          %1006 = vmatprep.subr.bf16.mxu0 0
          %1007 = vmatpush1.bf16.msra.mxu0 0
          %1008 = vmatprep.subr.bf16.mxu0 0
          %1009 = vmatpush1.bf16.msra.mxu0 0
          %1010 = vmatprep.subr.bf16.mxu0 0
          %1011 = vmatpush1.bf16.msra.mxu0 0
          %1012 = vmatprep.subr.bf16.mxu0 0
          %1013 = vmatpush1.bf16.msra.mxu0 0
          %1014 = vmatprep.subr.bf16.mxu0 0
          %1015 = vmatpush1.bf16.msra.mxu0 0
          %1016 = vmatprep.subr.bf16.mxu0 0
          %1017 = vmatpush1.bf16.msra.mxu0 0
          %1018 = vmatprep.subr.bf16.mxu0 0
          %1019 = vmatpush1.bf16.msra.mxu0 0
          %1020 = vmatprep.subr.bf16.mxu0 0
          %1021 = vmatpush1.bf16.msra.mxu0 0
          %1022 = vmatprep.subr.bf16.mxu0 0
          %1023 = vmatpush1.bf16.msra.mxu0 0
          %1024 = vmatprep.subr.bf16.mxu0 0
          %1025 = vmatpush1.bf16.msra.mxu0 0
          %1026 = vmatprep.subr.bf16.mxu0 0
          %1027 = vmatpush1.bf16.msra.mxu0 0
          %1028 = vmatprep.subr.bf16.mxu0 0
          %1029 = vmatpush1.bf16.msra.mxu0 0
          %1030 = vmatprep.subr.bf16.mxu0 0
          %1031 = vmatpush1.bf16.msra.mxu0 0
          %1032 = vmatprep.subr.bf16.mxu0 0
          %1033 = vmatpush1.bf16.msra.mxu0 0
          %1034 = vmatprep.mubr.bf16.mxu0 0
          %1035 = vmatmul.mubr.bf16.gmra.mrb[0].mxu0 %v1000
          %v1036 = vpop.f32.mrb[0].mxu0
          %v1037 = vadd.f32 0.0, %v1036
          %v1038 = vpop.f32.mrb[0].mxu0
          %v1039 = vpop.f32.mrb[0].mxu0
          %v1040 = vpop.f32.mrb[0].mxu0
          %1041 = vdwg.mxu0
          %v1044 = vunpack.c.l.b16 %v755
          %v1045 = vunpack.c.l.b16 %v756
          %v1046 = vpack.c.b16 %v1045, %v1044
          %v1049 = vsel %vm762, %v879, 0
          %1051 = vmatprep.subr.bf16.mxu0 0
          %1052 = vmatpush1.bf16.msra.mxu0 %v1046
          %1053 = vmatprep.subr.bf16.mxu0 0
          %1054 = vmatpush1.bf16.msra.mxu0 0
          %1055 = vmatprep.subr.bf16.mxu0 0
          %1056 = vmatpush1.bf16.msra.mxu0 0
          %1057 = vmatprep.subr.bf16.mxu0 0
          %1058 = vmatpush1.bf16.msra.mxu0 0
          %1059 = vmatprep.subr.bf16.mxu0 0
          %1060 = vmatpush1.bf16.msra.mxu0 0
          %1061 = vmatprep.subr.bf16.mxu0 0
          %1062 = vmatpush1.bf16.msra.mxu0 0
          %1063 = vmatprep.subr.bf16.mxu0 0
          %1064 = vmatpush1.bf16.msra.mxu0 0
          %1065 = vmatprep.subr.bf16.mxu0 0
          %1066 = vmatpush1.bf16.msra.mxu0 0
          %1067 = vmatprep.subr.bf16.mxu0 0
          %1068 = vmatpush1.bf16.msra.mxu0 0
          %1069 = vmatprep.subr.bf16.mxu0 0
          %1070 = vmatpush1.bf16.msra.mxu0 0
          %1071 = vmatprep.subr.bf16.mxu0 0
          %1072 = vmatpush1.bf16.msra.mxu0 0
          %1073 = vmatprep.subr.bf16.mxu0 0
          %1074 = vmatpush1.bf16.msra.mxu0 0
          %1075 = vmatprep.subr.bf16.mxu0 0
          %1076 = vmatpush1.bf16.msra.mxu0 0
          %1077 = vmatprep.subr.bf16.mxu0 0
          %1078 = vmatpush1.bf16.msra.mxu0 0
          %1079 = vmatprep.subr.bf16.mxu0 0
          %1080 = vmatpush1.bf16.msra.mxu0 0
          %1081 = vmatprep.subr.bf16.mxu0 0
          %1082 = vmatpush1.bf16.msra.mxu0 0
          %1083 = vmatprep.mubr.bf16.mxu0 0
          %1084 = vmatmul.mubr.bf16.gmra.mrb[0].mxu0 %v1049
          %v1085 = vpop.f32.mrb[0].mxu0
          %v1086 = vadd.f32 %v1037, %v1085
          %v1087 = vpop.f32.mrb[0].mxu0
          %v1088 = vpop.f32.mrb[0].mxu0
          %v1089 = vpop.f32.mrb[0].mxu0
          %1090 = vdwg.mxu0
          %s1091 = scalar_lea.vmem %s7, %s675
          %v1092 = vld [vmem:[%s1091] sm:$0x1]
          %v1094 = vlaneseq
          %v1095 = vshrl.u32 %v1094, 7
          %v1096 = vsub.s32 0, %v1095
          %v1097 = vrot.slane %v1092, %v1096
          %v1099 = vadd.f32 %v1086, %v1097
          %v1100 = vadd.f32 %v1099, %v680
          %s1101 = scalar_lea.vmem %s8, %s675
          %v1102 = vld [vmem:[%s1101] sm:$0x1]
          %s1103 = scalar_lea.vmem %s9, %s675
          %v1104 = vld [vmem:[%s1103] sm:$0x1]
          %v1105 = vsel %vm642, %v1100, 0.0
          %1106 = vadd.xlane.f32.xlu0 %v1105
          %v1107 = vpop.xlane.xlu0 %1106
          %v1108 = vmul.f32 %v1107, %v646
          %v1109 = vsub.f32 %v1100, %v1108
          %v1110 = vmul.f32 %v1109, %v1109
          %v1111 = vsel %vm642, %v1110, 0.0
          %1112 = vadd.xlane.f32.xlu0 %v1111
          %v1113 = vpop.xlane.xlu0 %1112
          %v1114 = vmul.f32 %v1113, %v646
          %v1115 = vadd.f32 %v1114, 1e-12
          %v1116 = vrsqrt.pop %v1115
          %v1117 = vmul.f32 %v1109, %v1116
          %v1119 = vlaneseq
          %v1120 = vshrl.u32 %v1119, 7
          %v1121 = vsub.s32 0, %v1120
          %v1122 = vrot.slane %v1102, %v1121
          %v1124 = vmul.f32 %v1117, %v1122
          %v1126 = vlaneseq
          %v1127 = vshrl.u32 %v1126, 7
          %v1128 = vsub.s32 0, %v1127
          %v1129 = vrot.slane %v1104, %v1128
          %v1131 = vadd.f32 %v1124, %v1129
          %v1132 = vpack.c.bf16 %v1131, %v1131
          %s1133 = smul.addr %s682, 4
          %s1134 = scalar_lea.vmem %s10, %s1133
          %v1135 = vld [vmem:[%s1134] sm:$0xf]
          %v1136 = vld [vmem:[%s1134 + $0x4] sm:$0xf]
          %v1137 = vld [vmem:[%s1134 + $0x8] sm:$0xf]
          %v1138 = vld [vmem:[%s1134 + $0xc] sm:$0xf]
          %s1139 = scalar_lea.vmem %s11, %s675
          %v1140 = vld [vmem:[%s1139] sm:$0x1]
          %v1142 = vlaneseq
          %v1143 = vshrl.u32 %v1142, 7
          %v1144 = vsub.s32 0, %v1143
          %v1145 = vrot.slane %v1140, %v1144
          %v1151 = vunpack.c.l.b16 %v1135
          %v1152 = vunpack.c.l.b16 %v1136
          %v1153 = vunpack.c.l.b16 %v1137
          %v1154 = vunpack.c.l.b16 %v1138
          %v1155 = vpack.c.b16 %v1152, %v1151
          %v1156 = vpack.c.b16 %v1154, %v1153
          %v1160 = vsel %vm642, %v1132, 0
          %1162 = vmatprep.subr.bf16.mxu0 0
          %1163 = vmatpush1.bf16.msra.mxu0 %v1155
          %1164 = vmatprep.subr.bf16.mxu0 0
          %1165 = vmatpush1.bf16.msra.mxu0 %v1156
          %1166 = vmatprep.subr.bf16.mxu0 0
          %1167 = vmatpush1.bf16.msra.mxu0 0
          %1168 = vmatprep.subr.bf16.mxu0 0
          %1169 = vmatpush1.bf16.msra.mxu0 0
          %1170 = vmatprep.subr.bf16.mxu0 0
          %1171 = vmatpush1.bf16.msra.mxu0 0
          %1172 = vmatprep.subr.bf16.mxu0 0
          %1173 = vmatpush1.bf16.msra.mxu0 0
          %1174 = vmatprep.subr.bf16.mxu0 0
          %1175 = vmatpush1.bf16.msra.mxu0 0
          %1176 = vmatprep.subr.bf16.mxu0 0
          %1177 = vmatpush1.bf16.msra.mxu0 0
          %1178 = vmatprep.subr.bf16.mxu0 0
          %1179 = vmatpush1.bf16.msra.mxu0 0
          %1180 = vmatprep.subr.bf16.mxu0 0
          %1181 = vmatpush1.bf16.msra.mxu0 0
          %1182 = vmatprep.subr.bf16.mxu0 0
          %1183 = vmatpush1.bf16.msra.mxu0 0
          %1184 = vmatprep.subr.bf16.mxu0 0
          %1185 = vmatpush1.bf16.msra.mxu0 0
          %1186 = vmatprep.subr.bf16.mxu0 0
          %1187 = vmatpush1.bf16.msra.mxu0 0
          %1188 = vmatprep.subr.bf16.mxu0 0
          %1189 = vmatpush1.bf16.msra.mxu0 0
          %1190 = vmatprep.subr.bf16.mxu0 0
          %1191 = vmatpush1.bf16.msra.mxu0 0
          %1192 = vmatprep.subr.bf16.mxu0 0
          %1193 = vmatpush1.bf16.msra.mxu0 0
          %1194 = vmatprep.mubr.bf16.mxu0 0
          %1195 = vmatmul.mubr.bf16.gmra.mrb[0].mxu0 %v1160
          %v1196 = vpop.f32.mrb[0].mxu0
          %v1197 = vadd.f32 %v1145, %v1196
          %v1198 = vpop.f32.mrb[0].mxu0
          %v1199 = vpop.f32.mrb[0].mxu0
          %v1200 = vpop.f32.mrb[0].mxu0
          %1201 = vdwg.mxu0
          %v1202 = vmul.f32 %v1197, 0.5
          %v1203 = vmul.f32 %v1197, 0.70710677
          %v1204 = verf.f32.pop %v1203
          %v1205 = vadd.f32 %v1204, 1.0
          %v1206 = vmul.f32 %v1202, %v1205
          %v1207 = vpack.c.bf16 %v1206, %v1206
          %s1208 = smul.u32 %s675, 8
          %s1209 = smul.addr %s1208, 4
          %s1210 = scalar_lea.vmem %s12, %s1209
          %v1211 = vld [vmem:[%s1210] sm:$0xf]
          %v1212 = vld [vmem:[%s1210 + $0x4] sm:$0xf]
          %v1213 = vld [vmem:[%s1210 + $0x8] sm:$0xf]
          %v1214 = vld [vmem:[%s1210 + $0xc] sm:$0xf]
          %v1215 = vld [vmem:[%s1210 + $0x10] sm:$0xf]
          %v1216 = vld [vmem:[%s1210 + $0x14] sm:$0xf]
          %v1217 = vld [vmem:[%s1210 + $0x18] sm:$0xf]
          %v1218 = vld [vmem:[%s1210 + $0x1c] sm:$0xf]
          %s1219 = scalar_lea.vmem %s13, %s675
          %v1220 = vld [vmem:[%s1219] sm:$0x1]
          %v1222 = vlaneseq
          %v1223 = vshrl.u32 %v1222, 7
          %v1224 = vsub.s32 0, %v1223
          %v1225 = vrot.slane %v1220, %v1224
          %v1235 = vunpack.c.l.b16 %v1211
          %v1236 = vunpack.c.l.b16 %v1212
          %v1237 = vunpack.c.l.b16 %v1213
          %v1238 = vunpack.c.l.b16 %v1214
          %v1239 = vunpack.c.l.b16 %v1215
          %v1240 = vunpack.c.l.b16 %v1216
          %v1241 = vunpack.c.l.b16 %v1217
          %v1242 = vunpack.c.l.b16 %v1218
          %v1243 = vpack.c.b16 %v1236, %v1235
          %v1244 = vpack.c.b16 %v1238, %v1237
          %v1245 = vpack.c.b16 %v1240, %v1239
          %v1246 = vpack.c.b16 %v1242, %v1241
          %vm1251 = vcmask 523264
          %v1253 = vsel %vm1251, %v1207, 0
          %1255 = vmatprep.subr.bf16.mxu0 0
          %1256 = vmatpush1.bf16.msra.mxu0 %v1243
          %1257 = vmatprep.subr.bf16.mxu0 0
          %1258 = vmatpush1.bf16.msra.mxu0 %v1244
          %1259 = vmatprep.subr.bf16.mxu0 0
          %1260 = vmatpush1.bf16.msra.mxu0 %v1245
          %1261 = vmatprep.subr.bf16.mxu0 0
          %1262 = vmatpush1.bf16.msra.mxu0 %v1246
          %1263 = vmatprep.subr.bf16.mxu0 0
          %1264 = vmatpush1.bf16.msra.mxu0 0
          %1265 = vmatprep.subr.bf16.mxu0 0
          %1266 = vmatpush1.bf16.msra.mxu0 0
          %1267 = vmatprep.subr.bf16.mxu0 0
          %1268 = vmatpush1.bf16.msra.mxu0 0
          %1269 = vmatprep.subr.bf16.mxu0 0
          %1270 = vmatpush1.bf16.msra.mxu0 0
          %1271 = vmatprep.subr.bf16.mxu0 0
          %1272 = vmatpush1.bf16.msra.mxu0 0
          %1273 = vmatprep.subr.bf16.mxu0 0
          %1274 = vmatpush1.bf16.msra.mxu0 0
          %1275 = vmatprep.subr.bf16.mxu0 0
          %1276 = vmatpush1.bf16.msra.mxu0 0
          %1277 = vmatprep.subr.bf16.mxu0 0
          %1278 = vmatpush1.bf16.msra.mxu0 0
          %1279 = vmatprep.subr.bf16.mxu0 0
          %1280 = vmatpush1.bf16.msra.mxu0 0
          %1281 = vmatprep.subr.bf16.mxu0 0
          %1282 = vmatpush1.bf16.msra.mxu0 0
          %1283 = vmatprep.subr.bf16.mxu0 0
          %1284 = vmatpush1.bf16.msra.mxu0 0
          %1285 = vmatprep.subr.bf16.mxu0 0
          %1286 = vmatpush1.bf16.msra.mxu0 0
          %1287 = vmatprep.mubr.bf16.mxu0 0
          %1288 = vmatmul.mubr.bf16.gmra.mrb[0].mxu0 %v1253
          %v1289 = vpop.f32.mrb[0].mxu0
          %v1290 = vadd.f32 %v1225, %v1289
          %v1291 = vpop.f32.mrb[0].mxu0
          %v1292 = vpop.f32.mrb[0].mxu0
          %v1293 = vpop.f32.mrb[0].mxu0
          %1294 = vdwg.mxu0
          %v1295 = vadd.f32 %v1290, %v1131
          %s1296 = scalar_lea.vmem %s14, %s675
          %v1297 = vld [vmem:[%s1296] sm:$0x1]
          %s1298 = scalar_lea.vmem %s15, %s675
          %v1299 = vld [vmem:[%s1298] sm:$0x1]
          %v1300 = vsel %vm642, %v1295, 0.0
          %1301 = vadd.xlane.f32.xlu0 %v1300
          %v1302 = vpop.xlane.xlu0 %1301
          %v1303 = vmul.f32 %v1302, %v646
          %v1304 = vsub.f32 %v1295, %v1303
          %v1305 = vmul.f32 %v1304, %v1304
          %v1306 = vsel %vm642, %v1305, 0.0
          %1307 = vadd.xlane.f32.xlu0 %v1306
          %v1308 = vpop.xlane.xlu0 %1307
          %v1309 = vmul.f32 %v1308, %v646
          %v1310 = vadd.f32 %v1309, 1e-12
          %v1311 = vrsqrt.pop %v1310
          %v1312 = vmul.f32 %v1304, %v1311
          %v1314 = vlaneseq
          %v1315 = vshrl.u32 %v1314, 7
          %v1316 = vsub.s32 0, %v1315
          %v1317 = vrot.slane %v1297, %v1316
          %v1319 = vmul.f32 %v1312, %v1317
          %v1321 = vlaneseq
          %v1322 = vshrl.u32 %v1321, 7
          %v1323 = vsub.s32 0, %v1322
          %v1324 = vrot.slane %v1299, %v1323
          %v1326 = vadd.f32 %v1319, %v1324
        $region105: #{bert_classifier_forward.1} parent=99 // loop_footer
          %s679 = sadd.s32 1, %s675
        $region106: #{bert_classifier_forward.1} parent=99 // loop_footer_branch
          %674 = sbr.rel target = $region102
        $region107: #{bert_classifier_forward.1} parent=99 // loop_exit
          _
        %v1327 = vpack.c.bf16 %v680, %v680
        %v1328 = vld [vmem:[%s16] sm:$0xf]
        %v1329 = vld [vmem:[%s16 + $0x4] sm:$0xf]
        %v1330 = vld [vmem:[%s16 + $0x8] sm:$0xf]
        %v1331 = vld [vmem:[%s16 + $0xc] sm:$0xf]
        %v1332 = vld [vmem:[%s17] sm:$0x1]
        %v1337 = vunpack.c.l.b16 %v1328
        %v1338 = vunpack.c.l.b16 %v1329
        %v1339 = vunpack.c.l.b16 %v1330
        %v1340 = vunpack.c.l.b16 %v1331
        %v1341 = vpack.c.b16 %v1338, %v1337
        %v1342 = vpack.c.b16 %v1340, %v1339
        %v1346 = vsel %vm642, %v1327, 0
        %1348 = vmatprep.subr.bf16.mxu0 0
        %1349 = vmatpush1.bf16.msra.mxu0 %v1341
        %1350 = vmatprep.subr.bf16.mxu0 0
        %1351 = vmatpush1.bf16.msra.mxu0 %v1342
        %1352 = vmatprep.subr.bf16.mxu0 0
        %1353 = vmatpush1.bf16.msra.mxu0 0
        %1354 = vmatprep.subr.bf16.mxu0 0
        %1355 = vmatpush1.bf16.msra.mxu0 0
        %1356 = vmatprep.subr.bf16.mxu0 0
        %1357 = vmatpush1.bf16.msra.mxu0 0
        %1358 = vmatprep.subr.bf16.mxu0 0
        %1359 = vmatpush1.bf16.msra.mxu0 0
        %1360 = vmatprep.subr.bf16.mxu0 0
        %1361 = vmatpush1.bf16.msra.mxu0 0
        %1362 = vmatprep.subr.bf16.mxu0 0
        %1363 = vmatpush1.bf16.msra.mxu0 0
        %1364 = vmatprep.subr.bf16.mxu0 0
        %1365 = vmatpush1.bf16.msra.mxu0 0
        %1366 = vmatprep.subr.bf16.mxu0 0
        %1367 = vmatpush1.bf16.msra.mxu0 0
        %1368 = vmatprep.subr.bf16.mxu0 0
        %1369 = vmatpush1.bf16.msra.mxu0 0
        %1370 = vmatprep.subr.bf16.mxu0 0
        %1371 = vmatpush1.bf16.msra.mxu0 0
        %1372 = vmatprep.subr.bf16.mxu0 0
        %1373 = vmatpush1.bf16.msra.mxu0 0
        %1374 = vmatprep.subr.bf16.mxu0 0
        %1375 = vmatpush1.bf16.msra.mxu0 0
        %1376 = vmatprep.subr.bf16.mxu0 0
        %1377 = vmatpush1.bf16.msra.mxu0 0
        %1378 = vmatprep.subr.bf16.mxu0 0
        %1379 = vmatpush1.bf16.msra.mxu0 0
        %1380 = vmatprep.mubr.bf16.mxu0 0
        %1381 = vmatmul.mubr.bf16.gmra.mrb[0].mxu0 %v1346
        %v1382 = vpop.f32.mrb[0].mxu0
        %v1383 = vadd.f32 %v1332, %v1382
        %v1384 = vpop.f32.mrb[0].mxu0
        %v1385 = vpop.f32.mrb[0].mxu0
        %v1386 = vpop.f32.mrb[0].mxu0
        %1387 = vdwg.mxu0
        %v1388 = vtanh.pop %v1383
        %v1389 = vpack.c.bf16 %v1388, %v1388
        %v1390 = vld [vmem:[%s18] sm:$0xf]
        %v1391 = vld [vmem:[%s18 + $0x4] sm:$0xf]
        %v1392 = vld [vmem:[%s18 + $0x8] sm:$0xf]
        %v1393 = vld [vmem:[%s18 + $0xc] sm:$0xf]
        %v1394 = vld [vmem:[%s19] sm:$0x1]
        %v1399 = vunpack.c.l.b16 %v1390
        %v1400 = vunpack.c.l.b16 %v1391
        %v1401 = vunpack.c.l.b16 %v1392
        %v1402 = vunpack.c.l.b16 %v1393
        %v1403 = vpack.c.b16 %v1400, %v1399
        %v1404 = vpack.c.b16 %v1402, %v1401
        %v1408 = vsel %vm642, %v1389, 0
        %1410 = vmatprep.subr.bf16.mxu0 0
        %1411 = vmatpush1.bf16.msra.mxu0 %v1403
        %1412 = vmatprep.subr.bf16.mxu0 0
        %1413 = vmatpush1.bf16.msra.mxu0 %v1404
        %1414 = vmatprep.subr.bf16.mxu0 0
        %1415 = vmatpush1.bf16.msra.mxu0 0
        %1416 = vmatprep.subr.bf16.mxu0 0
        %1417 = vmatpush1.bf16.msra.mxu0 0
        %1418 = vmatprep.subr.bf16.mxu0 0
        %1419 = vmatpush1.bf16.msra.mxu0 0
        %1420 = vmatprep.subr.bf16.mxu0 0
        %1421 = vmatpush1.bf16.msra.mxu0 0
        %1422 = vmatprep.subr.bf16.mxu0 0
        %1423 = vmatpush1.bf16.msra.mxu0 0
        %1424 = vmatprep.subr.bf16.mxu0 0
        %1425 = vmatpush1.bf16.msra.mxu0 0
        %1426 = vmatprep.subr.bf16.mxu0 0
        %1427 = vmatpush1.bf16.msra.mxu0 0
        %1428 = vmatprep.subr.bf16.mxu0 0
        %1429 = vmatpush1.bf16.msra.mxu0 0
        %1430 = vmatprep.subr.bf16.mxu0 0
        %1431 = vmatpush1.bf16.msra.mxu0 0
        %1432 = vmatprep.subr.bf16.mxu0 0
        %1433 = vmatpush1.bf16.msra.mxu0 0
        %1434 = vmatprep.subr.bf16.mxu0 0
        %1435 = vmatpush1.bf16.msra.mxu0 0
        %1436 = vmatprep.subr.bf16.mxu0 0
        %1437 = vmatpush1.bf16.msra.mxu0 0
        %1438 = vmatprep.subr.bf16.mxu0 0
        %1439 = vmatpush1.bf16.msra.mxu0 0
        %1440 = vmatprep.subr.bf16.mxu0 0
        %1441 = vmatpush1.bf16.msra.mxu0 0
        %1442 = vmatprep.mubr.bf16.mxu0 0
        %1443 = vmatmul.mubr.bf16.gmra.mrb[0].mxu0 %v1408
        %v1444 = vpop.f32.mrb[0].mxu0
        %v1445 = vadd.f32 %v1394, %v1444
        %v1446 = vpop.f32.mrb[0].mxu0
        %v1447 = vpop.f32.mrb[0].mxu0
        %v1448 = vpop.f32.mrb[0].mxu0
        %1449 = vdwg.mxu0
        %vm1450 = vcmask 16384
        %v1451 = vsel %vm1450, %v1445, -inf
        %1452 = vmax.xlane.f32.xlu0 %v1451
        %v1453 = vpop.xlane.xlu0 %1452
        %v1454 = vsub.f32 %v1445, %v1453
        %v1455 = vmul.f32 %v1454, 1.442695
        %v1456 = vpow.pop %v1455
        %v1457 = vsel %vm1450, %v1456, 0.0
        %1458 = vadd.xlane.f32.xlu0 %v1457
        %v1459 = vpop.xlane.xlu0 %1458
        %v1460 = vrcp.pop %v1459
        %v1461 = vmul.f32 %v1456, %v1460
        %1462 = vst.msk [vmem:[%s630] sm:$0x1] %vm1450, %v1461
        %s1463 = sand.u32 %s472, 1
        %s1464 = scalar_lea.sflag [#allocation3], %s1463
        %s1465 = sand.u32 %s472, 1
        %s1466 = scalar_lea.vmem [#allocation2], %s1465
        // Predicated region
        $region108: #{bert_classifier_forward.1} parent=99 // pred_check
          %p1467 = pneg %p482
        $region109: #{bert_classifier_forward.1} parent=99 // pred_check_branch
          %1469 = sbr.rel (%p1467) target = $region111
        $region110: #{bert_classifier_forward.1} parent=99 // pred_region
          %s1471 = ssub.s32 16, 16
          %1472 = vsyncadd %s1464, %s1471
          %s1473 = smul.addr %s34, 16
          %s1474 = scalar_lea.hbm %s20, %s1473
          %s1476 = sshll.u32 %s1466, 4
          %s1477 = int_to_ptr.vmem [resolvable:$true] %s1476
          %1479 = dma.vmem_to_hbm [thread:$0]  %s1477, 16, %s1474, %s1464
        $region111: #{bert_classifier_forward.1} parent=99 // pred_fallthru
          _
      $region100: #{bert_classifier_forward.1} parent=5 // pred_fallthru
        _
      %p1480 = scmp.le.s32.totalorder 2, %s29
      // Predicated region
      $region112: #{bert_classifier_forward.1} parent=5 // pred_check
        %p1481 = pneg %p1480
      $region113: #{bert_classifier_forward.1} parent=5 // pred_check_branch
        %1483 = sbr.rel (%p1481) target = $region115
      $region114: #{bert_classifier_forward.1} parent=5 // pred_region
        %s1484 = ssub.s32 %s29, 2
        // Predicated region
        $region116: #{bert_classifier_forward.1} parent=114 // pred_check
          %p1485 = pneg %p488
        $region117: #{bert_classifier_forward.1} parent=114 // pred_check_branch
          %1487 = sbr.rel (%p1485) target = $region119
        $region118: #{bert_classifier_forward.1} parent=114 // pred_region
          %s1488 = sand.u32 %s473, 1
          %s1489 = scalar_lea.sflag [#allocation3], %s1488
          %s1490 = sand.u32 %s473, 1
          %s1491 = scalar_lea.vmem [#allocation2], %s1490
          %1492 = dma.done %s1489, 16
        $region119: #{bert_classifier_forward.1} parent=114 // pred_fallthru
          _
      $region115: #{bert_classifier_forward.1} parent=5 // pred_fallthru
        _
    $region6: #{bert_classifier_forward.1} parent=1 // loop_footer
      %s33 = sadd.s32 1, %s29
    $region7: #{bert_classifier_forward.1} parent=1 // loop_footer_branch
      %28 = sbr.rel target = $region3
    $region8: #{bert_classifier_forward.1} parent=1 // loop_exit
      _
    %1493 = vsyncpa [#allocation3], 1
    %s1494 = scalar_lea.sflag [#allocation3], 1
    %1495 = vsyncpa %s1494, 1

</llo_original>
